<compile_context>
chip_gen: v7x
topology: tpu7x:2x2x1
jax: 0.10.0
libtpu: 0.0.40
codegen_flags: <defaults>
</compile_context>

<pallas_src>
import jax
import jax.numpy as jnp
from jax.experimental import pallas as pl
from jax.experimental.pallas import tpu as pltpu

# Sizes implied by the module: Linear(84, 7) after Conv2d(128, 2, 1x1)
#   => 2 * H * W == 84  =>  H * W == 42  (Connect-Four board: 6 x 7)
C_IN, C_OUT = 128, 2
H, W = 6, 7
S = H * W                   # 42
FLAT_IN = C_IN * S          # 5376  (lane-dense: multiple of 128)
FLAT_MID = C_OUT * S        # 84
N_CLASSES = 7


def policy_head_kernel(x_ref, w_ref, b_ref, out_ref):
    # Fused 1x1-conv + flatten + dense as a single bf16 MXU contraction,
    # accumulated in f32.
    x = x_ref[...].astype(jnp.bfloat16)                       # (TN, 5376)
    logits = (jnp.dot(x, w_ref[...], preferred_element_type=jnp.float32)
              + b_ref[...])                                    # (TN, 7) f32

    # Numerically stable softmax over the class dim (PyTorch dim=1), f32,
    # exact divide (probabilities sum to 1 up to f32 rounding).
    m = jnp.max(logits, axis=-1, keepdims=True)
    e = jnp.exp(logits - m)
    out_ref[...] = (e / jnp.sum(e, axis=-1, keepdims=True)).astype(out_ref.dtype)


def fold_policy_head_params(wc, bc, wd, bd):
    """Fold the 1x1 conv into the dense layer.  Call ONCE per parameter set.

    Returns (w_eff_bf16 (5376, 7), b_eff_f32 (1, 7)) with
      W_eff[c*S+s, j] = sum_o wc[o,c] * wd[j, o*S+s]
      b_eff[j]        = bd[j] + sum_o bc[o] * sum_s wd[j, o*S+s]
    so that logits = x_flat @ W_eff + b_eff  with x_flat the NCHW flatten.
    """
    wc2 = wc.reshape(C_OUT, C_IN)                 # (2, 128)
    wd_r = wd.reshape(N_CLASSES, C_OUT, S)        # (7, 2, 42)
    w_eff = jnp.einsum("oc,jos->csj", wc2, wd_r).reshape(FLAT_IN, N_CLASSES)
    b_eff = (bd + jnp.einsum("o,jos->j", bc, wd_r)).reshape(1, N_CLASSES)
    return w_eff.astype(jnp.bfloat16), b_eff.astype(jnp.float32)


def _round_up(x, m):
    return ((x + m - 1) // m) * m


def policy_head(x_nchw, w_eff, b_eff, *, tn=512, min_grid=2):
    """x_nchw: (N, 128, 6, 7). Returns (N, 7) softmax probabilities (f32)."""
    N = x_nchw.shape[0]
    # Free view (contiguous NCHW flatten) -> lane-dense (N, 5376). No HBM copy.
    x_flat = x_nchw.reshape(N, FLAT_IN)

    # Batch tile selection:
    #  * N <= 8: block equals the full batch dim (always a legal block shape),
    #    single grid step, zero padding.
    #  * otherwise: TN multiple of 8 (sublane), capped at `tn`, and sized so
    #    there are >= min_grid steps (keeps both v7x TensorCores busy).  A
    #    ragged last tile is a Pallas partial block: OOB rows are read as
    #    garbage but never written back.
    if N <= 8:
        TN = N
    else:
        TN = max(8, min(tn, _round_up(pl.cdiv(N, min_grid), 8)))
    grid = pl.cdiv(N, TN)

    return pl.pallas_call(
        policy_head_kernel,
        out_shape=jax.ShapeDtypeStruct((N, N_CLASSES), jnp.float32),
        grid_spec=pltpu.PrefetchScalarGridSpec(
            num_scalar_prefetch=0,
            grid=(grid,),
            in_specs=[
                pl.BlockSpec((TN, FLAT_IN), lambda i: (i, 0)),         # x tile
                pl.BlockSpec((FLAT_IN, N_CLASSES), lambda i: (0, 0)),  # W_eff (resident)
                pl.BlockSpec((1, N_CLASSES), lambda i: (0, 0)),        # b_eff
            ],
            # Each grid step owns its own (TN, 7) output tile.
            out_specs=pl.BlockSpec((TN, N_CLASSES), lambda i: (i, 0)),
        ),
        compiler_params=pltpu.CompilerParams(
            dimension_semantics=("parallel",),
            # ~22 MiB double-buffered x (TN=512, f32) + ~2.7 MiB bf16 weight
            # buffers; raise the scoped limit so v5e's 16 MiB default (and the
            # 32 MiB default elsewhere) never forces single-buffering.
            vmem_limit_bytes=40 * 1024 * 1024,
        ),
    )(x_flat, w_eff, b_eff)


def reference(x_nchw, wc, bc, wd, bd):
    """Pure-JAX f32 reference matching the PyTorch forward."""
    N = x_nchw.shape[0]
    y = jnp.einsum("oc,nchw->nohw", wc.reshape(C_OUT, C_IN), x_nchw) \
        + bc.reshape(1, C_OUT, 1, 1)
    flat = y.reshape(N, -1)
    logits = flat @ wd.T + bd
    return jax.nn.softmax(logits, axis=1)


if __name__ == "__main__":
    key = jax.random.PRNGKey(0)
    k1, k2, k3, k4, k5 = jax.random.split(key, 5)

    N = 2
    x = jax.random.normal(k1, (N, C_IN, H, W), jnp.float32)
    # Deterministic synthetic parameters (shapes match nn.Conv2d / nn.Linear)
    wc = jax.random.normal(k2, (C_OUT, C_IN, 1, 1), jnp.float32) * 0.05
    bc = jax.random.normal(k3, (C_OUT,), jnp.float32) * 0.05
    wd = jax.random.normal(k4, (N_CLASSES, FLAT_MID), jnp.float32) * 0.05
    bd = jax.random.normal(k5, (N_CLASSES,), jnp.float32) * 0.05

    # Fold once (parameter-load time), reuse across forward calls.
    w_eff, b_eff = fold_policy_head_params(wc, bc, wd, bd)

    out = jax.block_until_ready(policy_head(x, w_eff, b_eff))
    ref = reference(x, wc, bc, wd, bd)

    assert out.shape == (N, N_CLASSES)
    # Tolerance accounts for the bf16 MXU contraction (f32 accumulate); the
    # softmax itself is exact f32.
    assert jnp.allclose(out, ref, atol=5e-3, rtol=5e-3), (out, ref)
    print("KERNEL_OK")
</pallas_src>

<mosaic_0001>
module attributes {stable_mosaic.version = 11 : i64} {
  func.func @policy_head_kernel(%arg0: i32, %arg1: memref<2x5376xf32, #tpu.memory_space<vmem>>, %arg2: memref<5376x7xbf16, #tpu.memory_space<vmem>>, %arg3: memref<1x7xf32, #tpu.memory_space<vmem>>, %arg4: memref<2x7xf32, #tpu.memory_space<vmem>>) attributes {dimension_semantics = [#tpu.dimension_semantics<parallel>], iteration_bounds = array<i64: 1>, scalar_prefetch = 0 : i64, scratch_operands = 0 : i64, tpu.core_type = #tpu.core_type<tc>, window_params = [{transform_indices = @transform_0, window_bounds = array<i64: 2, 5376>}, {pipeline_mode = #tpu.pipeline_mode<synchronous>, transform_indices = @transform_1, window_bounds = array<i64: 5376, 7>}, {pipeline_mode = #tpu.pipeline_mode<synchronous>, transform_indices = @transform_2, window_bounds = array<i64: 1, 7>}, {transform_indices = @transform_3, window_bounds = array<i64: 2, 7>}]} {
    %c0 = arith.constant 0 : index
    %c0_0 = arith.constant 0 : index
    %0 = vector.load %arg1[%c0, %c0_0] : memref<2x5376xf32, #tpu.memory_space<vmem>>, vector<2x5376xf32>
    %1 = arith.truncf %0 : vector<2x5376xf32> to vector<2x5376xbf16>
    %c0_1 = arith.constant 0 : index
    %c0_2 = arith.constant 0 : index
    %2 = vector.load %arg2[%c0_1, %c0_2] : memref<5376x7xbf16, #tpu.memory_space<vmem>>, vector<5376x7xbf16>
    %cst = arith.constant dense<0.000000e+00> : vector<2x7xf32>
    %3 = tpu.matmul %1, %2, %cst {dimension_numbers = #tpu.dot_dimension_numbers<[1], [0], [0], [1], [0, 0, 1, 1], [], []>} : vector<2x5376xbf16>, vector<5376x7xbf16>, vector<2x7xf32> -> vector<2x7xf32>
    %c0_3 = arith.constant 0 : index
    %c0_4 = arith.constant 0 : index
    %4 = vector.load %arg3[%c0_3, %c0_4] : memref<1x7xf32, #tpu.memory_space<vmem>>, vector<1x7xf32>
    %5 = vector.broadcast %4 : vector<1x7xf32> to vector<2x7xf32>
    %6 = arith.addf %3, %5 : vector<2x7xf32>
    %cst_5 = arith.constant dense<0xFF800000> : vector<2xf32>
    %7 = vector.multi_reduction <maximumf>, %6, %cst_5 [1] : vector<2x7xf32> to vector<2xf32>
    %8 = vector.shape_cast %7 : vector<2xf32> to vector<2x1xf32>
    %9 = vector.broadcast %8 : vector<2x1xf32> to vector<2x7xf32>
    %10 = arith.subf %6, %9 : vector<2x7xf32>
    %11 = math.exp %10 : vector<2x7xf32>
    %cst_6 = arith.constant dense<0.000000e+00> : vector<2xf32>
    %12 = vector.multi_reduction <add>, %11, %cst_6 [1] : vector<2x7xf32> to vector<2xf32>
    %13 = vector.shape_cast %12 : vector<2xf32> to vector<2x1xf32>
    %14 = vector.broadcast %13 : vector<2x1xf32> to vector<2x7xf32>
    %15 = arith.divf %11, %14 : vector<2x7xf32>
    %c0_7 = arith.constant 0 : index
    %c0_8 = arith.constant 0 : index
    %16 = vector.load %arg4[%c0_7, %c0_8] : memref<2x7xf32, #tpu.memory_space<vmem>>, vector<2x7xf32>
    tpu.vector_store %arg4[%c0_7, %c0_8], %15 {strides = array<i32>} : memref<2x7xf32, #tpu.memory_space<vmem>>, vector<2x7xf32>,
    return
  }
  func.func @transform_0(%arg0: i32) -> (i32, i32) {
    %c0_i32 = arith.constant 0 : i32
    %c0_i32_0 = arith.constant 0 : i32
    return %arg0, %c0_i32 : i32, i32
  }
  func.func @transform_1(%arg0: i32) -> (i32, i32) {
    %c0_i32 = arith.constant 0 : i32
    %c0_i32_0 = arith.constant 0 : i32
    %c0_i32_1 = arith.constant 0 : i32
    return %c0_i32, %c0_i32_0 : i32, i32
  }
  func.func @transform_2(%arg0: i32) -> (i32, i32) {
    %c0_i32 = arith.constant 0 : i32
    %c0_i32_0 = arith.constant 0 : i32
    %c0_i32_1 = arith.constant 0 : i32
    return %c0_i32, %c0_i32_0 : i32, i32
  }
  func.func @transform_3(%arg0: i32) -> (i32, i32) {
    %c0_i32 = arith.constant 0 : i32
    %c0_i32_0 = arith.constant 0 : i32
    return %arg0, %c0_i32 : i32, i32
  }
}

</mosaic_0001>

<llo_original>
// kernel: tpu_custom_call.1
$region0: #{tpu_custom_call.1}
  #allocation0 [shape = 'u32[]', space=smem, size = 0x4, offset = 0x4, fixed_abs, tag = 'smem constant byte address 0x4 - core index']
  #allocation1 [shape = 'u32[144,128]{1,0:T(1,128)}', space=vmem, size = 0x12000, scoped, tag = 'internal scratch']
  %s0 = inlined_call_operand.vmem [shape: f32[2,5376], index: 0, kind: input, shape index: {}]
  %s1 = inlined_call_operand.vmem [shape: bf16[5376,7], index: 1, kind: input, shape index: {}]
  %s2 = inlined_call_operand.vmem [shape: f32[1,7], index: 2, kind: input, shape index: {}]
  %s3 = inlined_call_operand.hbm [shape: f32[2,7], index: 3, kind: output, shape index: {}]
  %s4 = sld [smem:[#allocation0]]
  $region22: #{tpu_custom_call.1} parent=0
    _
  %s6 = ssub.s32 1, %s4
  %s7 = scalar_select 0, %s6, %s4
  $region1: #{tpu_custom_call.1} parent=0
    #allocation2 [shape = 'u8[1024]{0}', space=vmem, size = 0x400, scoped, tag = 'output window, operand 0, single buffered']
    #allocation3 [shape = 's32[1]{0}', space=sflag, size = 0x4, scoped, tag = 'scoped memory for tpu_custom_call.1']
    %8 = vsyncpa [#allocation3], 0
    // Predicated region
    $region2: #{tpu_custom_call.1} parent=1 // pred_check
      _
    $region3: #{tpu_custom_call.1} parent=1 // pred_check_branch
      %10 = sbr.rel (0) target = $region5
    $region4: #{tpu_custom_call.1} parent=1 // pred_region
      _
    $region5: #{tpu_custom_call.1} parent=1 // pred_fallthru
      _
    // Predicated region
    $region6: #{tpu_custom_call.1} parent=1 // pred_check
      _
    $region7: #{tpu_custom_call.1} parent=1 // pred_check_branch
      %12 = sbr.rel (0) target = $region9
    $region8: #{tpu_custom_call.1} parent=1 // pred_region
      _
    $region9: #{tpu_custom_call.1} parent=1 // pred_fallthru
      _
    // Predicated region
    $region10: #{tpu_custom_call.1} parent=1 // pred_check
      _
    $region11: #{tpu_custom_call.1} parent=1 // pred_check_branch
      %14 = sbr.rel (0) target = $region13
    $region12: #{tpu_custom_call.1} parent=1 // pred_region
      _
    $region13: #{tpu_custom_call.1} parent=1 // pred_fallthru
      _
    %v16 = vld [vmem:[%s0] sm:$0xff]
    %v17 = vld [vmem:[%s0 + $0x8] sm:$0xff]
    %v18 = vld [vmem:[%s0 + $0x10] sm:$0xff]
    %v19 = vld [vmem:[%s0 + $0x18] sm:$0xff]
    %v20 = vld [vmem:[%s0 + $0x20] sm:$0xff]
    %v21 = vld [vmem:[%s0 + $0x28] sm:$0xff]
    %v22 = vld [vmem:[%s0 + $0x30] sm:$0xff]
    %v23 = vld [vmem:[%s0 + $0x38] sm:$0xff]
    %v24 = vld [vmem:[%s0 + $0x40] sm:$0xff]
    %v25 = vld [vmem:[%s0 + $0x48] sm:$0xff]
    %v26 = vld [vmem:[%s0 + $0x50] sm:$0xf]
    %v38 = vcombine.high %v16, %v16
    %v40 = vunpack.c.l.s4 1983009808
    %v41 = vunpack.c.0.s8 %v40
    %v42 = vlaneseq
    %v43 = vshrl.u32 %v42, 7
    %v44 = vsub.s32 %v41, %v43
    %v45 = vrot.slane %v16, %v44
    %v47 = vunpack.c.l.s4 1983009808
    %v48 = vunpack.c.0.s8 %v47
    %v49 = vlaneseq
    %v50 = vshrl.u32 %v49, 7
    %v51 = vsub.s32 %v48, %v50
    %v52 = vrot.slane %v38, %v51
    %v53 = vcombine.high %v45, %v45
    %v54 = vcombine.high %v52, %v52
    %v55 = vcombine.high %v17, %v17
    %v57 = vunpack.c.l.s4 1983009808
    %v58 = vunpack.c.0.s8 %v57
    %v59 = vlaneseq
    %v60 = vshrl.u32 %v59, 7
    %v61 = vsub.s32 %v58, %v60
    %v62 = vrot.slane %v17, %v61
    %v64 = vunpack.c.l.s4 1983009808
    %v65 = vunpack.c.0.s8 %v64
    %v66 = vlaneseq
    %v67 = vshrl.u32 %v66, 7
    %v68 = vsub.s32 %v65, %v67
    %v69 = vrot.slane %v55, %v68
    %v70 = vcombine.high %v62, %v62
    %v71 = vcombine.high %v69, %v69
    %v72 = vcombine.high %v18, %v18
    %v74 = vunpack.c.l.s4 1983009808
    %v75 = vunpack.c.0.s8 %v74
    %v76 = vlaneseq
    %v77 = vshrl.u32 %v76, 7
    %v78 = vsub.s32 %v75, %v77
    %v79 = vrot.slane %v18, %v78
    %v81 = vunpack.c.l.s4 1983009808
    %v82 = vunpack.c.0.s8 %v81
    %v83 = vlaneseq
    %v84 = vshrl.u32 %v83, 7
    %v85 = vsub.s32 %v82, %v84
    %v86 = vrot.slane %v72, %v85
    %v87 = vcombine.high %v79, %v79
    %v88 = vcombine.high %v86, %v86
    %v89 = vcombine.high %v19, %v19
    %v91 = vunpack.c.l.s4 1983009808
    %v92 = vunpack.c.0.s8 %v91
    %v93 = vlaneseq
    %v94 = vshrl.u32 %v93, 7
    %v95 = vsub.s32 %v92, %v94
    %v96 = vrot.slane %v19, %v95
    %v98 = vunpack.c.l.s4 1983009808
    %v99 = vunpack.c.0.s8 %v98
    %v100 = vlaneseq
    %v101 = vshrl.u32 %v100, 7
    %v102 = vsub.s32 %v99, %v101
    %v103 = vrot.slane %v89, %v102
    %v104 = vcombine.high %v96, %v96
    %v105 = vcombine.high %v103, %v103
    %v106 = vcombine.high %v20, %v20
    %v108 = vunpack.c.l.s4 1983009808
    %v109 = vunpack.c.0.s8 %v108
    %v110 = vlaneseq
    %v111 = vshrl.u32 %v110, 7
    %v112 = vsub.s32 %v109, %v111
    %v113 = vrot.slane %v20, %v112
    %v115 = vunpack.c.l.s4 1983009808
    %v116 = vunpack.c.0.s8 %v115
    %v117 = vlaneseq
    %v118 = vshrl.u32 %v117, 7
    %v119 = vsub.s32 %v116, %v118
    %v120 = vrot.slane %v106, %v119
    %v121 = vcombine.high %v113, %v113
    %v122 = vcombine.high %v120, %v120
    %v123 = vcombine.high %v21, %v21
    %v125 = vunpack.c.l.s4 1983009808
    %v126 = vunpack.c.0.s8 %v125
    %v127 = vlaneseq
    %v128 = vshrl.u32 %v127, 7
    %v129 = vsub.s32 %v126, %v128
    %v130 = vrot.slane %v21, %v129
    %v132 = vunpack.c.l.s4 1983009808
    %v133 = vunpack.c.0.s8 %v132
    %v134 = vlaneseq
    %v135 = vshrl.u32 %v134, 7
    %v136 = vsub.s32 %v133, %v135
    %v137 = vrot.slane %v123, %v136
    %v138 = vcombine.high %v130, %v130
    %v139 = vcombine.high %v137, %v137
    %v140 = vcombine.high %v22, %v22
    %v142 = vunpack.c.l.s4 1983009808
    %v143 = vunpack.c.0.s8 %v142
    %v144 = vlaneseq
    %v145 = vshrl.u32 %v144, 7
    %v146 = vsub.s32 %v143, %v145
    %v147 = vrot.slane %v22, %v146
    %v149 = vunpack.c.l.s4 1983009808
    %v150 = vunpack.c.0.s8 %v149
    %v151 = vlaneseq
    %v152 = vshrl.u32 %v151, 7
    %v153 = vsub.s32 %v150, %v152
    %v154 = vrot.slane %v140, %v153
    %v155 = vcombine.high %v147, %v147
    %v156 = vcombine.high %v154, %v154
    %v157 = vcombine.high %v23, %v23
    %v159 = vunpack.c.l.s4 1983009808
    %v160 = vunpack.c.0.s8 %v159
    %v161 = vlaneseq
    %v162 = vshrl.u32 %v161, 7
    %v163 = vsub.s32 %v160, %v162
    %v164 = vrot.slane %v23, %v163
    %v166 = vunpack.c.l.s4 1983009808
    %v167 = vunpack.c.0.s8 %v166
    %v168 = vlaneseq
    %v169 = vshrl.u32 %v168, 7
    %v170 = vsub.s32 %v167, %v169
    %v171 = vrot.slane %v157, %v170
    %v172 = vcombine.high %v164, %v164
    %v173 = vcombine.high %v171, %v171
    %v174 = vcombine.high %v24, %v24
    %v176 = vunpack.c.l.s4 1983009808
    %v177 = vunpack.c.0.s8 %v176
    %v178 = vlaneseq
    %v179 = vshrl.u32 %v178, 7
    %v180 = vsub.s32 %v177, %v179
    %v181 = vrot.slane %v24, %v180
    %v183 = vunpack.c.l.s4 1983009808
    %v184 = vunpack.c.0.s8 %v183
    %v185 = vlaneseq
    %v186 = vshrl.u32 %v185, 7
    %v187 = vsub.s32 %v184, %v186
    %v188 = vrot.slane %v174, %v187
    %v189 = vcombine.high %v181, %v181
    %v190 = vcombine.high %v188, %v188
    %v191 = vcombine.high %v25, %v25
    %v193 = vunpack.c.l.s4 1983009808
    %v194 = vunpack.c.0.s8 %v193
    %v195 = vlaneseq
    %v196 = vshrl.u32 %v195, 7
    %v197 = vsub.s32 %v194, %v196
    %v198 = vrot.slane %v25, %v197
    %v200 = vunpack.c.l.s4 1983009808
    %v201 = vunpack.c.0.s8 %v200
    %v202 = vlaneseq
    %v203 = vshrl.u32 %v202, 7
    %v204 = vsub.s32 %v201, %v203
    %v205 = vrot.slane %v191, %v204
    %v206 = vcombine.high %v198, %v198
    %v207 = vcombine.high %v205, %v205
    %v209 = vunpack.c.l.s4 1983009808
    %v210 = vunpack.c.0.s8 %v209
    %v211 = vlaneseq
    %v212 = vshrl.u32 %v211, 7
    %v213 = vsub.s32 %v210, %v212
    %v214 = vrot.slane %v26, %v213
    %v215 = vcombine.high %v214, %v214
    %v258 = vpack.c.bf16 %v45, %v45
    %v259 = vpack.c.bf16 %v53, %v53
    %v260 = vpack.c.bf16 %v52, %v52
    %v261 = vpack.c.bf16 %v54, %v54
    %v262 = vpack.c.bf16 %v62, %v62
    %v263 = vpack.c.bf16 %v70, %v70
    %v264 = vpack.c.bf16 %v69, %v69
    %v265 = vpack.c.bf16 %v71, %v71
    %v266 = vpack.c.bf16 %v79, %v79
    %v267 = vpack.c.bf16 %v87, %v87
    %v268 = vpack.c.bf16 %v86, %v86
    %v269 = vpack.c.bf16 %v88, %v88
    %v270 = vpack.c.bf16 %v96, %v96
    %v271 = vpack.c.bf16 %v104, %v104
    %v272 = vpack.c.bf16 %v103, %v103
    %v273 = vpack.c.bf16 %v105, %v105
    %v274 = vpack.c.bf16 %v113, %v113
    %v275 = vpack.c.bf16 %v121, %v121
    %v276 = vpack.c.bf16 %v120, %v120
    %v277 = vpack.c.bf16 %v122, %v122
    %v278 = vpack.c.bf16 %v130, %v130
    %v279 = vpack.c.bf16 %v138, %v138
    %v280 = vpack.c.bf16 %v137, %v137
    %v281 = vpack.c.bf16 %v139, %v139
    %v282 = vpack.c.bf16 %v147, %v147
    %v283 = vpack.c.bf16 %v155, %v155
    %v284 = vpack.c.bf16 %v154, %v154
    %v285 = vpack.c.bf16 %v156, %v156
    %v286 = vpack.c.bf16 %v164, %v164
    %v287 = vpack.c.bf16 %v172, %v172
    %v288 = vpack.c.bf16 %v171, %v171
    %v289 = vpack.c.bf16 %v173, %v173
    %v290 = vpack.c.bf16 %v181, %v181
    %v291 = vpack.c.bf16 %v189, %v189
    %v292 = vpack.c.bf16 %v188, %v188
    %v293 = vpack.c.bf16 %v190, %v190
    %v294 = vpack.c.bf16 %v198, %v198
    %v295 = vpack.c.bf16 %v206, %v206
    %v296 = vpack.c.bf16 %v205, %v205
    %v297 = vpack.c.bf16 %v207, %v207
    %v298 = vpack.c.bf16 %v214, %v214
    %v299 = vpack.c.bf16 %v215, %v215
    %v300 = vld [vmem:[%s1] sm:$0xf]
    %v301 = vld [vmem:[%s1 + $0x4] sm:$0xf]
    %v302 = vld [vmem:[%s1 + $0x8] sm:$0xf]
    %v303 = vld [vmem:[%s1 + $0xc] sm:$0xf]
    %v304 = vld [vmem:[%s1 + $0x10] sm:$0xf]
    %v305 = vld [vmem:[%s1 + $0x14] sm:$0xf]
    %v306 = vld [vmem:[%s1 + $0x18] sm:$0xf]
    %v307 = vld [vmem:[%s1 + $0x1c] sm:$0xf]
    %v308 = vld [vmem:[%s1 + $0x20] sm:$0xf]
    %v309 = vld [vmem:[%s1 + $0x24] sm:$0xf]
    %v310 = vld [vmem:[%s1 + $0x28] sm:$0xf]
    %v311 = vld [vmem:[%s1 + $0x2c] sm:$0xf]
    %v312 = vld [vmem:[%s1 + $0x30] sm:$0xf]
    %v313 = vld [vmem:[%s1 + $0x34] sm:$0xf]
    %v314 = vld [vmem:[%s1 + $0x38] sm:$0xf]
    %v315 = vld [vmem:[%s1 + $0x3c] sm:$0xf]
    %v316 = vld [vmem:[%s1 + $0x40] sm:$0xf]
    %v317 = vld [vmem:[%s1 + $0x44] sm:$0xf]
    %v318 = vld [vmem:[%s1 + $0x48] sm:$0xf]
    %v319 = vld [vmem:[%s1 + $0x4c] sm:$0xf]
    %v320 = vld [vmem:[%s1 + $0x50] sm:$0xf]
    %v321 = vld [vmem:[%s1 + $0x54] sm:$0xf]
    %v322 = vld [vmem:[%s1 + $0x58] sm:$0xf]
    %v323 = vld [vmem:[%s1 + $0x5c] sm:$0xf]
    %v324 = vld [vmem:[%s1 + $0x60] sm:$0xf]
    %v325 = vld [vmem:[%s1 + $0x64] sm:$0xf]
    %v326 = vld [vmem:[%s1 + $0x68] sm:$0xf]
    %v327 = vld [vmem:[%s1 + $0x6c] sm:$0xf]
    %v328 = vld [vmem:[%s1 + $0x70] sm:$0xf]
    %v329 = vld [vmem:[%s1 + $0x74] sm:$0xf]
    %v330 = vld [vmem:[%s1 + $0x78] sm:$0xf]
    %v331 = vld [vmem:[%s1 + $0x7c] sm:$0xf]
    %v332 = vld [vmem:[%s1 + $0x80] sm:$0xf]
    %v333 = vld [vmem:[%s1 + $0x84] sm:$0xf]
    %v334 = vld [vmem:[%s1 + $0x88] sm:$0xf]
    %v335 = vld [vmem:[%s1 + $0x8c] sm:$0xf]
    %v336 = vld [vmem:[%s1 + $0x90] sm:$0xf]
    %v337 = vld [vmem:[%s1 + $0x94] sm:$0xf]
    %v338 = vld [vmem:[%s1 + $0x98] sm:$0xf]
    %v339 = vld [vmem:[%s1 + $0x9c] sm:$0xf]
    %v340 = vld [vmem:[%s1 + $0xa0] sm:$0xf]
    %v341 = vld [vmem:[%s1 + $0xa4] sm:$0xf]
    %v342 = vld [vmem:[%s1 + $0xa8] sm:$0xf]
    %v343 = vld [vmem:[%s1 + $0xac] sm:$0xf]
    %v344 = vld [vmem:[%s1 + $0xb0] sm:$0xf]
    %v345 = vld [vmem:[%s1 + $0xb4] sm:$0xf]
    %v346 = vld [vmem:[%s1 + $0xb8] sm:$0xf]
    %v347 = vld [vmem:[%s1 + $0xbc] sm:$0xf]
    %v348 = vld [vmem:[%s1 + $0xc0] sm:$0xf]
    %v349 = vld [vmem:[%s1 + $0xc4] sm:$0xf]
    %v350 = vld [vmem:[%s1 + $0xc8] sm:$0xf]
    %v351 = vld [vmem:[%s1 + $0xcc] sm:$0xf]
    %v352 = vld [vmem:[%s1 + $0xd0] sm:$0xf]
    %v353 = vld [vmem:[%s1 + $0xd4] sm:$0xf]
    %v354 = vld [vmem:[%s1 + $0xd8] sm:$0xf]
    %v355 = vld [vmem:[%s1 + $0xdc] sm:$0xf]
    %v356 = vld [vmem:[%s1 + $0xe0] sm:$0xf]
    %v357 = vld [vmem:[%s1 + $0xe4] sm:$0xf]
    %v358 = vld [vmem:[%s1 + $0xe8] sm:$0xf]
    %v359 = vld [vmem:[%s1 + $0xec] sm:$0xf]
    %v360 = vld [vmem:[%s1 + $0xf0] sm:$0xf]
    %v361 = vld [vmem:[%s1 + $0xf4] sm:$0xf]
    %v362 = vld [vmem:[%s1 + $0xf8] sm:$0xf]
    %v363 = vld [vmem:[%s1 + $0xfc] sm:$0xf]
    %v364 = vld [vmem:[%s1 + $0x100] sm:$0xf]
    %v365 = vld [vmem:[%s1 + $0x104] sm:$0xf]
    %v366 = vld [vmem:[%s1 + $0x108] sm:$0xf]
    %v367 = vld [vmem:[%s1 + $0x10c] sm:$0xf]
    %v368 = vld [vmem:[%s1 + $0x110] sm:$0xf]
    %v369 = vld [vmem:[%s1 + $0x114] sm:$0xf]
    %v370 = vld [vmem:[%s1 + $0x118] sm:$0xf]
    %v371 = vld [vmem:[%s1 + $0x11c] sm:$0xf]
    %v372 = vld [vmem:[%s1 + $0x120] sm:$0xf]
    %v373 = vld [vmem:[%s1 + $0x124] sm:$0xf]
    %v374 = vld [vmem:[%s1 + $0x128] sm:$0xf]
    %v375 = vld [vmem:[%s1 + $0x12c] sm:$0xf]
    %v376 = vld [vmem:[%s1 + $0x130] sm:$0xf]
    %v377 = vld [vmem:[%s1 + $0x134] sm:$0xf]
    %v378 = vld [vmem:[%s1 + $0x138] sm:$0xf]
    %v379 = vld [vmem:[%s1 + $0x13c] sm:$0xf]
    %v380 = vld [vmem:[%s1 + $0x140] sm:$0xf]
    %v381 = vld [vmem:[%s1 + $0x144] sm:$0xf]
    %v382 = vld [vmem:[%s1 + $0x148] sm:$0xf]
    %v383 = vld [vmem:[%s1 + $0x14c] sm:$0xf]
    %v384 = vld [vmem:[%s1 + $0x150] sm:$0xf]
    %v385 = vld [vmem:[%s1 + $0x154] sm:$0xf]
    %v386 = vld [vmem:[%s1 + $0x158] sm:$0xf]
    %v387 = vld [vmem:[%s1 + $0x15c] sm:$0xf]
    %v388 = vld [vmem:[%s1 + $0x160] sm:$0xf]
    %v389 = vld [vmem:[%s1 + $0x164] sm:$0xf]
    %v390 = vld [vmem:[%s1 + $0x168] sm:$0xf]
    %v391 = vld [vmem:[%s1 + $0x16c] sm:$0xf]
    %v392 = vld [vmem:[%s1 + $0x170] sm:$0xf]
    %v393 = vld [vmem:[%s1 + $0x174] sm:$0xf]
    %v394 = vld [vmem:[%s1 + $0x178] sm:$0xf]
    %v395 = vld [vmem:[%s1 + $0x17c] sm:$0xf]
    %v396 = vld [vmem:[%s1 + $0x180] sm:$0xf]
    %v397 = vld [vmem:[%s1 + $0x184] sm:$0xf]
    %v398 = vld [vmem:[%s1 + $0x188] sm:$0xf]
    %v399 = vld [vmem:[%s1 + $0x18c] sm:$0xf]
    %v400 = vld [vmem:[%s1 + $0x190] sm:$0xf]
    %v401 = vld [vmem:[%s1 + $0x194] sm:$0xf]
    %v402 = vld [vmem:[%s1 + $0x198] sm:$0xf]
    %v403 = vld [vmem:[%s1 + $0x19c] sm:$0xf]
    %v404 = vld [vmem:[%s1 + $0x1a0] sm:$0xf]
    %v405 = vld [vmem:[%s1 + $0x1a4] sm:$0xf]
    %v406 = vld [vmem:[%s1 + $0x1a8] sm:$0xf]
    %v407 = vld [vmem:[%s1 + $0x1ac] sm:$0xf]
    %v408 = vld [vmem:[%s1 + $0x1b0] sm:$0xf]
    %v409 = vld [vmem:[%s1 + $0x1b4] sm:$0xf]
    %v410 = vld [vmem:[%s1 + $0x1b8] sm:$0xf]
    %v411 = vld [vmem:[%s1 + $0x1bc] sm:$0xf]
    %v412 = vld [vmem:[%s1 + $0x1c0] sm:$0xf]
    %v413 = vld [vmem:[%s1 + $0x1c4] sm:$0xf]
    %v414 = vld [vmem:[%s1 + $0x1c8] sm:$0xf]
    %v415 = vld [vmem:[%s1 + $0x1cc] sm:$0xf]
    %v416 = vld [vmem:[%s1 + $0x1d0] sm:$0xf]
    %v417 = vld [vmem:[%s1 + $0x1d4] sm:$0xf]
    %v418 = vld [vmem:[%s1 + $0x1d8] sm:$0xf]
    %v419 = vld [vmem:[%s1 + $0x1dc] sm:$0xf]
    %v420 = vld [vmem:[%s1 + $0x1e0] sm:$0xf]
    %v421 = vld [vmem:[%s1 + $0x1e4] sm:$0xf]
    %v422 = vld [vmem:[%s1 + $0x1e8] sm:$0xf]
    %v423 = vld [vmem:[%s1 + $0x1ec] sm:$0xf]
    %v424 = vld [vmem:[%s1 + $0x1f0] sm:$0xf]
    %v425 = vld [vmem:[%s1 + $0x1f4] sm:$0xf]
    %v426 = vld [vmem:[%s1 + $0x1f8] sm:$0xf]
    %v427 = vld [vmem:[%s1 + $0x1fc] sm:$0xf]
    %v428 = vld [vmem:[%s1 + $0x200] sm:$0xf]
    %v429 = vld [vmem:[%s1 + $0x204] sm:$0xf]
    %v430 = vld [vmem:[%s1 + $0x208] sm:$0xf]
    %v431 = vld [vmem:[%s1 + $0x20c] sm:$0xf]
    %v432 = vld [vmem:[%s1 + $0x210] sm:$0xf]
    %v433 = vld [vmem:[%s1 + $0x214] sm:$0xf]
    %v434 = vld [vmem:[%s1 + $0x218] sm:$0xf]
    %v435 = vld [vmem:[%s1 + $0x21c] sm:$0xf]
    %v436 = vld [vmem:[%s1 + $0x220] sm:$0xf]
    %v437 = vld [vmem:[%s1 + $0x224] sm:$0xf]
    %v438 = vld [vmem:[%s1 + $0x228] sm:$0xf]
    %v439 = vld [vmem:[%s1 + $0x22c] sm:$0xf]
    %v440 = vld [vmem:[%s1 + $0x230] sm:$0xf]
    %v441 = vld [vmem:[%s1 + $0x234] sm:$0xf]
    %v442 = vld [vmem:[%s1 + $0x238] sm:$0xf]
    %v443 = vld [vmem:[%s1 + $0x23c] sm:$0xf]
    %v444 = vld [vmem:[%s1 + $0x240] sm:$0xf]
    %v445 = vld [vmem:[%s1 + $0x244] sm:$0xf]
    %v446 = vld [vmem:[%s1 + $0x248] sm:$0xf]
    %v447 = vld [vmem:[%s1 + $0x24c] sm:$0xf]
    %v448 = vld [vmem:[%s1 + $0x250] sm:$0xf]
    %v449 = vld [vmem:[%s1 + $0x254] sm:$0xf]
    %v450 = vld [vmem:[%s1 + $0x258] sm:$0xf]
    %v451 = vld [vmem:[%s1 + $0x25c] sm:$0xf]
    %v452 = vld [vmem:[%s1 + $0x260] sm:$0xf]
    %v453 = vld [vmem:[%s1 + $0x264] sm:$0xf]
    %v454 = vld [vmem:[%s1 + $0x268] sm:$0xf]
    %v455 = vld [vmem:[%s1 + $0x26c] sm:$0xf]
    %v456 = vld [vmem:[%s1 + $0x270] sm:$0xf]
    %v457 = vld [vmem:[%s1 + $0x274] sm:$0xf]
    %v458 = vld [vmem:[%s1 + $0x278] sm:$0xf]
    %v459 = vld [vmem:[%s1 + $0x27c] sm:$0xf]
    %v460 = vld [vmem:[%s1 + $0x280] sm:$0xf]
    %v461 = vld [vmem:[%s1 + $0x284] sm:$0xf]
    %v462 = vld [vmem:[%s1 + $0x288] sm:$0xf]
    %v463 = vld [vmem:[%s1 + $0x28c] sm:$0xf]
    %v464 = vld [vmem:[%s1 + $0x290] sm:$0xf]
    %v465 = vld [vmem:[%s1 + $0x294] sm:$0xf]
    %v466 = vld [vmem:[%s1 + $0x298] sm:$0xf]
    %v467 = vld [vmem:[%s1 + $0x29c] sm:$0xf]
    %v468 = vld [vmem:[%s1 + $0x2a0] sm:$0xf]
    %v469 = vld [vmem:[%s1 + $0x2a4] sm:$0xf]
    %v470 = vld [vmem:[%s1 + $0x2a8] sm:$0xf]
    %v471 = vld [vmem:[%s1 + $0x2ac] sm:$0xf]
    %v472 = vld [vmem:[%s1 + $0x2b0] sm:$0xf]
    %v473 = vld [vmem:[%s1 + $0x2b4] sm:$0xf]
    %v474 = vld [vmem:[%s1 + $0x2b8] sm:$0xf]
    %v475 = vld [vmem:[%s1 + $0x2bc] sm:$0xf]
    %v476 = vld [vmem:[%s1 + $0x2c0] sm:$0xf]
    %v477 = vld [vmem:[%s1 + $0x2c4] sm:$0xf]
    %v478 = vld [vmem:[%s1 + $0x2c8] sm:$0xf]
    %v479 = vld [vmem:[%s1 + $0x2cc] sm:$0xf]
    %v480 = vld [vmem:[%s1 + $0x2d0] sm:$0xf]
    %v481 = vld [vmem:[%s1 + $0x2d4] sm:$0xf]
    %v482 = vld [vmem:[%s1 + $0x2d8] sm:$0xf]
    %v483 = vld [vmem:[%s1 + $0x2dc] sm:$0xf]
    %v484 = vld [vmem:[%s1 + $0x2e0] sm:$0xf]
    %v485 = vld [vmem:[%s1 + $0x2e4] sm:$0xf]
    %v486 = vld [vmem:[%s1 + $0x2e8] sm:$0xf]
    %v487 = vld [vmem:[%s1 + $0x2ec] sm:$0xf]
    %v488 = vld [vmem:[%s1 + $0x2f0] sm:$0xf]
    %v489 = vld [vmem:[%s1 + $0x2f4] sm:$0xf]
    %v490 = vld [vmem:[%s1 + $0x2f8] sm:$0xf]
    %v491 = vld [vmem:[%s1 + $0x2fc] sm:$0xf]
    %v492 = vld [vmem:[%s1 + $0x300] sm:$0xf]
    %v493 = vld [vmem:[%s1 + $0x304] sm:$0xf]
    %v494 = vld [vmem:[%s1 + $0x308] sm:$0xf]
    %v495 = vld [vmem:[%s1 + $0x30c] sm:$0xf]
    %v496 = vld [vmem:[%s1 + $0x310] sm:$0xf]
    %v497 = vld [vmem:[%s1 + $0x314] sm:$0xf]
    %v498 = vld [vmem:[%s1 + $0x318] sm:$0xf]
    %v499 = vld [vmem:[%s1 + $0x31c] sm:$0xf]
    %v500 = vld [vmem:[%s1 + $0x320] sm:$0xf]
    %v501 = vld [vmem:[%s1 + $0x324] sm:$0xf]
    %v502 = vld [vmem:[%s1 + $0x328] sm:$0xf]
    %v503 = vld [vmem:[%s1 + $0x32c] sm:$0xf]
    %v504 = vld [vmem:[%s1 + $0x330] sm:$0xf]
    %v505 = vld [vmem:[%s1 + $0x334] sm:$0xf]
    %v506 = vld [vmem:[%s1 + $0x338] sm:$0xf]
    %v507 = vld [vmem:[%s1 + $0x33c] sm:$0xf]
    %v508 = vld [vmem:[%s1 + $0x340] sm:$0xf]
    %v509 = vld [vmem:[%s1 + $0x344] sm:$0xf]
    %v510 = vld [vmem:[%s1 + $0x348] sm:$0xf]
    %v511 = vld [vmem:[%s1 + $0x34c] sm:$0xf]
    %v512 = vld [vmem:[%s1 + $0x350] sm:$0xf]
    %v513 = vld [vmem:[%s1 + $0x354] sm:$0xf]
    %v514 = vld [vmem:[%s1 + $0x358] sm:$0xf]
    %v515 = vld [vmem:[%s1 + $0x35c] sm:$0xf]
    %v516 = vld [vmem:[%s1 + $0x360] sm:$0xf]
    %v517 = vld [vmem:[%s1 + $0x364] sm:$0xf]
    %v518 = vld [vmem:[%s1 + $0x368] sm:$0xf]
    %v519 = vld [vmem:[%s1 + $0x36c] sm:$0xf]
    %v520 = vld [vmem:[%s1 + $0x370] sm:$0xf]
    %v521 = vld [vmem:[%s1 + $0x374] sm:$0xf]
    %v522 = vld [vmem:[%s1 + $0x378] sm:$0xf]
    %v523 = vld [vmem:[%s1 + $0x37c] sm:$0xf]
    %v524 = vld [vmem:[%s1 + $0x380] sm:$0xf]
    %v525 = vld [vmem:[%s1 + $0x384] sm:$0xf]
    %v526 = vld [vmem:[%s1 + $0x388] sm:$0xf]
    %v527 = vld [vmem:[%s1 + $0x38c] sm:$0xf]
    %v528 = vld [vmem:[%s1 + $0x390] sm:$0xf]
    %v529 = vld [vmem:[%s1 + $0x394] sm:$0xf]
    %v530 = vld [vmem:[%s1 + $0x398] sm:$0xf]
    %v531 = vld [vmem:[%s1 + $0x39c] sm:$0xf]
    %v532 = vld [vmem:[%s1 + $0x3a0] sm:$0xf]
    %v533 = vld [vmem:[%s1 + $0x3a4] sm:$0xf]
    %v534 = vld [vmem:[%s1 + $0x3a8] sm:$0xf]
    %v535 = vld [vmem:[%s1 + $0x3ac] sm:$0xf]
    %v536 = vld [vmem:[%s1 + $0x3b0] sm:$0xf]
    %v537 = vld [vmem:[%s1 + $0x3b4] sm:$0xf]
    %v538 = vld [vmem:[%s1 + $0x3b8] sm:$0xf]
    %v539 = vld [vmem:[%s1 + $0x3bc] sm:$0xf]
    %v540 = vld [vmem:[%s1 + $0x3c0] sm:$0xf]
    %v541 = vld [vmem:[%s1 + $0x3c4] sm:$0xf]
    %v542 = vld [vmem:[%s1 + $0x3c8] sm:$0xf]
    %v543 = vld [vmem:[%s1 + $0x3cc] sm:$0xf]
    %v544 = vld [vmem:[%s1 + $0x3d0] sm:$0xf]
    %v545 = vld [vmem:[%s1 + $0x3d4] sm:$0xf]
    %v546 = vld [vmem:[%s1 + $0x3d8] sm:$0xf]
    %v547 = vld [vmem:[%s1 + $0x3dc] sm:$0xf]
    %v548 = vld [vmem:[%s1 + $0x3e0] sm:$0xf]
    %v549 = vld [vmem:[%s1 + $0x3e4] sm:$0xf]
    %v550 = vld [vmem:[%s1 + $0x3e8] sm:$0xf]
    %v551 = vld [vmem:[%s1 + $0x3ec] sm:$0xf]
    %v552 = vld [vmem:[%s1 + $0x3f0] sm:$0xf]
    %v553 = vld [vmem:[%s1 + $0x3f4] sm:$0xf]
    %v554 = vld [vmem:[%s1 + $0x3f8] sm:$0xf]
    %v555 = vld [vmem:[%s1 + $0x3fc] sm:$0xf]
    %v556 = vld [vmem:[%s1 + $0x400] sm:$0xf]
    %v557 = vld [vmem:[%s1 + $0x404] sm:$0xf]
    %v558 = vld [vmem:[%s1 + $0x408] sm:$0xf]
    %v559 = vld [vmem:[%s1 + $0x40c] sm:$0xf]
    %v560 = vld [vmem:[%s1 + $0x410] sm:$0xf]
    %v561 = vld [vmem:[%s1 + $0x414] sm:$0xf]
    %v562 = vld [vmem:[%s1 + $0x418] sm:$0xf]
    %v563 = vld [vmem:[%s1 + $0x41c] sm:$0xf]
    %v564 = vld [vmem:[%s1 + $0x420] sm:$0xf]
    %v565 = vld [vmem:[%s1 + $0x424] sm:$0xf]
    %v566 = vld [vmem:[%s1 + $0x428] sm:$0xf]
    %v567 = vld [vmem:[%s1 + $0x42c] sm:$0xf]
    %v568 = vld [vmem:[%s1 + $0x430] sm:$0xf]
    %v569 = vld [vmem:[%s1 + $0x434] sm:$0xf]
    %v570 = vld [vmem:[%s1 + $0x438] sm:$0xf]
    %v571 = vld [vmem:[%s1 + $0x43c] sm:$0xf]
    %v572 = vld [vmem:[%s1 + $0x440] sm:$0xf]
    %v573 = vld [vmem:[%s1 + $0x444] sm:$0xf]
    %v574 = vld [vmem:[%s1 + $0x448] sm:$0xf]
    %v575 = vld [vmem:[%s1 + $0x44c] sm:$0xf]
    %v576 = vld [vmem:[%s1 + $0x450] sm:$0xf]
    %v577 = vld [vmem:[%s1 + $0x454] sm:$0xf]
    %v578 = vld [vmem:[%s1 + $0x458] sm:$0xf]
    %v579 = vld [vmem:[%s1 + $0x45c] sm:$0xf]
    %v580 = vld [vmem:[%s1 + $0x460] sm:$0xf]
    %v581 = vld [vmem:[%s1 + $0x464] sm:$0xf]
    %v582 = vld [vmem:[%s1 + $0x468] sm:$0xf]
    %v583 = vld [vmem:[%s1 + $0x46c] sm:$0xf]
    %v584 = vld [vmem:[%s1 + $0x470] sm:$0xf]
    %v585 = vld [vmem:[%s1 + $0x474] sm:$0xf]
    %v586 = vld [vmem:[%s1 + $0x478] sm:$0xf]
    %v587 = vld [vmem:[%s1 + $0x47c] sm:$0xf]
    %v588 = vld [vmem:[%s1 + $0x480] sm:$0xf]
    %v589 = vld [vmem:[%s1 + $0x484] sm:$0xf]
    %v590 = vld [vmem:[%s1 + $0x488] sm:$0xf]
    %v591 = vld [vmem:[%s1 + $0x48c] sm:$0xf]
    %v592 = vld [vmem:[%s1 + $0x490] sm:$0xf]
    %v593 = vld [vmem:[%s1 + $0x494] sm:$0xf]
    %v594 = vld [vmem:[%s1 + $0x498] sm:$0xf]
    %v595 = vld [vmem:[%s1 + $0x49c] sm:$0xf]
    %v596 = vld [vmem:[%s1 + $0x4a0] sm:$0xf]
    %v597 = vld [vmem:[%s1 + $0x4a4] sm:$0xf]
    %v598 = vld [vmem:[%s1 + $0x4a8] sm:$0xf]
    %v599 = vld [vmem:[%s1 + $0x4ac] sm:$0xf]
    %v600 = vld [vmem:[%s1 + $0x4b0] sm:$0xf]
    %v601 = vld [vmem:[%s1 + $0x4b4] sm:$0xf]
    %v602 = vld [vmem:[%s1 + $0x4b8] sm:$0xf]
    %v603 = vld [vmem:[%s1 + $0x4bc] sm:$0xf]
    %v604 = vld [vmem:[%s1 + $0x4c0] sm:$0xf]
    %v605 = vld [vmem:[%s1 + $0x4c4] sm:$0xf]
    %v606 = vld [vmem:[%s1 + $0x4c8] sm:$0xf]
    %v607 = vld [vmem:[%s1 + $0x4cc] sm:$0xf]
    %v608 = vld [vmem:[%s1 + $0x4d0] sm:$0xf]
    %v609 = vld [vmem:[%s1 + $0x4d4] sm:$0xf]
    %v610 = vld [vmem:[%s1 + $0x4d8] sm:$0xf]
    %v611 = vld [vmem:[%s1 + $0x4dc] sm:$0xf]
    %v612 = vld [vmem:[%s1 + $0x4e0] sm:$0xf]
    %v613 = vld [vmem:[%s1 + $0x4e4] sm:$0xf]
    %v614 = vld [vmem:[%s1 + $0x4e8] sm:$0xf]
    %v615 = vld [vmem:[%s1 + $0x4ec] sm:$0xf]
    %v616 = vld [vmem:[%s1 + $0x4f0] sm:$0xf]
    %v617 = vld [vmem:[%s1 + $0x4f4] sm:$0xf]
    %v618 = vld [vmem:[%s1 + $0x4f8] sm:$0xf]
    %v619 = vld [vmem:[%s1 + $0x4fc] sm:$0xf]
    %v620 = vld [vmem:[%s1 + $0x500] sm:$0xf]
    %v621 = vld [vmem:[%s1 + $0x504] sm:$0xf]
    %v622 = vld [vmem:[%s1 + $0x508] sm:$0xf]
    %v623 = vld [vmem:[%s1 + $0x50c] sm:$0xf]
    %v624 = vld [vmem:[%s1 + $0x510] sm:$0xf]
    %v625 = vld [vmem:[%s1 + $0x514] sm:$0xf]
    %v626 = vld [vmem:[%s1 + $0x518] sm:$0xf]
    %v627 = vld [vmem:[%s1 + $0x51c] sm:$0xf]
    %v628 = vld [vmem:[%s1 + $0x520] sm:$0xf]
    %v629 = vld [vmem:[%s1 + $0x524] sm:$0xf]
    %v630 = vld [vmem:[%s1 + $0x528] sm:$0xf]
    %v631 = vld [vmem:[%s1 + $0x52c] sm:$0xf]
    %v632 = vld [vmem:[%s1 + $0x530] sm:$0xf]
    %v633 = vld [vmem:[%s1 + $0x534] sm:$0xf]
    %v634 = vld [vmem:[%s1 + $0x538] sm:$0xf]
    %v635 = vld [vmem:[%s1 + $0x53c] sm:$0xf]
    %v636 = vld [vmem:[%s1 + $0x540] sm:$0xf]
    %v637 = vld [vmem:[%s1 + $0x544] sm:$0xf]
    %v638 = vld [vmem:[%s1 + $0x548] sm:$0xf]
    %v639 = vld [vmem:[%s1 + $0x54c] sm:$0xf]
    %v640 = vld [vmem:[%s1 + $0x550] sm:$0xf]
    %v641 = vld [vmem:[%s1 + $0x554] sm:$0xf]
    %v642 = vld [vmem:[%s1 + $0x558] sm:$0xf]
    %v643 = vld [vmem:[%s1 + $0x55c] sm:$0xf]
    %v644 = vld [vmem:[%s1 + $0x560] sm:$0xf]
    %v645 = vld [vmem:[%s1 + $0x564] sm:$0xf]
    %v646 = vld [vmem:[%s1 + $0x568] sm:$0xf]
    %v647 = vld [vmem:[%s1 + $0x56c] sm:$0xf]
    %v648 = vld [vmem:[%s1 + $0x570] sm:$0xf]
    %v649 = vld [vmem:[%s1 + $0x574] sm:$0xf]
    %v650 = vld [vmem:[%s1 + $0x578] sm:$0xf]
    %v651 = vld [vmem:[%s1 + $0x57c] sm:$0xf]
    %v652 = vld [vmem:[%s1 + $0x580] sm:$0xf]
    %v653 = vld [vmem:[%s1 + $0x584] sm:$0xf]
    %v654 = vld [vmem:[%s1 + $0x588] sm:$0xf]
    %v655 = vld [vmem:[%s1 + $0x58c] sm:$0xf]
    %v656 = vld [vmem:[%s1 + $0x590] sm:$0xf]
    %v657 = vld [vmem:[%s1 + $0x594] sm:$0xf]
    %v658 = vld [vmem:[%s1 + $0x598] sm:$0xf]
    %v659 = vld [vmem:[%s1 + $0x59c] sm:$0xf]
    %v660 = vld [vmem:[%s1 + $0x5a0] sm:$0xf]
    %v661 = vld [vmem:[%s1 + $0x5a4] sm:$0xf]
    %v662 = vld [vmem:[%s1 + $0x5a8] sm:$0xf]
    %v663 = vld [vmem:[%s1 + $0x5ac] sm:$0xf]
    %v664 = vld [vmem:[%s1 + $0x5b0] sm:$0xf]
    %v665 = vld [vmem:[%s1 + $0x5b4] sm:$0xf]
    %v666 = vld [vmem:[%s1 + $0x5b8] sm:$0xf]
    %v667 = vld [vmem:[%s1 + $0x5bc] sm:$0xf]
    %v668 = vld [vmem:[%s1 + $0x5c0] sm:$0xf]
    %v669 = vld [vmem:[%s1 + $0x5c4] sm:$0xf]
    %v670 = vld [vmem:[%s1 + $0x5c8] sm:$0xf]
    %v671 = vld [vmem:[%s1 + $0x5cc] sm:$0xf]
    %v672 = vld [vmem:[%s1 + $0x5d0] sm:$0xf]
    %v673 = vld [vmem:[%s1 + $0x5d4] sm:$0xf]
    %v674 = vld [vmem:[%s1 + $0x5d8] sm:$0xf]
    %v675 = vld [vmem:[%s1 + $0x5dc] sm:$0xf]
    %v676 = vld [vmem:[%s1 + $0x5e0] sm:$0xf]
    %v677 = vld [vmem:[%s1 + $0x5e4] sm:$0xf]
    %v678 = vld [vmem:[%s1 + $0x5e8] sm:$0xf]
    %v679 = vld [vmem:[%s1 + $0x5ec] sm:$0xf]
    %v680 = vld [vmem:[%s1 + $0x5f0] sm:$0xf]
    %v681 = vld [vmem:[%s1 + $0x5f4] sm:$0xf]
    %v682 = vld [vmem:[%s1 + $0x5f8] sm:$0xf]
    %v683 = vld [vmem:[%s1 + $0x5fc] sm:$0xf]
    %v684 = vld [vmem:[%s1 + $0x600] sm:$0xf]
    %v685 = vld [vmem:[%s1 + $0x604] sm:$0xf]
    %v686 = vld [vmem:[%s1 + $0x608] sm:$0xf]
    %v687 = vld [vmem:[%s1 + $0x60c] sm:$0xf]
    %v688 = vld [vmem:[%s1 + $0x610] sm:$0xf]
    %v689 = vld [vmem:[%s1 + $0x614] sm:$0xf]
    %v690 = vld [vmem:[%s1 + $0x618] sm:$0xf]
    %v691 = vld [vmem:[%s1 + $0x61c] sm:$0xf]
    %v692 = vld [vmem:[%s1 + $0x620] sm:$0xf]
    %v693 = vld [vmem:[%s1 + $0x624] sm:$0xf]
    %v694 = vld [vmem:[%s1 + $0x628] sm:$0xf]
    %v695 = vld [vmem:[%s1 + $0x62c] sm:$0xf]
    %v696 = vld [vmem:[%s1 + $0x630] sm:$0xf]
    %v697 = vld [vmem:[%s1 + $0x634] sm:$0xf]
    %v698 = vld [vmem:[%s1 + $0x638] sm:$0xf]
    %v699 = vld [vmem:[%s1 + $0x63c] sm:$0xf]
    %v700 = vld [vmem:[%s1 + $0x640] sm:$0xf]
    %v701 = vld [vmem:[%s1 + $0x644] sm:$0xf]
    %v702 = vld [vmem:[%s1 + $0x648] sm:$0xf]
    %v703 = vld [vmem:[%s1 + $0x64c] sm:$0xf]
    %v704 = vld [vmem:[%s1 + $0x650] sm:$0xf]
    %v705 = vld [vmem:[%s1 + $0x654] sm:$0xf]
    %v706 = vld [vmem:[%s1 + $0x658] sm:$0xf]
    %v707 = vld [vmem:[%s1 + $0x65c] sm:$0xf]
    %v708 = vld [vmem:[%s1 + $0x660] sm:$0xf]
    %v709 = vld [vmem:[%s1 + $0x664] sm:$0xf]
    %v710 = vld [vmem:[%s1 + $0x668] sm:$0xf]
    %v711 = vld [vmem:[%s1 + $0x66c] sm:$0xf]
    %v712 = vld [vmem:[%s1 + $0x670] sm:$0xf]
    %v713 = vld [vmem:[%s1 + $0x674] sm:$0xf]
    %v714 = vld [vmem:[%s1 + $0x678] sm:$0xf]
    %v715 = vld [vmem:[%s1 + $0x67c] sm:$0xf]
    %v716 = vld [vmem:[%s1 + $0x680] sm:$0xf]
    %v717 = vld [vmem:[%s1 + $0x684] sm:$0xf]
    %v718 = vld [vmem:[%s1 + $0x688] sm:$0xf]
    %v719 = vld [vmem:[%s1 + $0x68c] sm:$0xf]
    %v720 = vld [vmem:[%s1 + $0x690] sm:$0xf]
    %v721 = vld [vmem:[%s1 + $0x694] sm:$0xf]
    %v722 = vld [vmem:[%s1 + $0x698] sm:$0xf]
    %v723 = vld [vmem:[%s1 + $0x69c] sm:$0xf]
    %v724 = vld [vmem:[%s1 + $0x6a0] sm:$0xf]
    %v725 = vld [vmem:[%s1 + $0x6a4] sm:$0xf]
    %v726 = vld [vmem:[%s1 + $0x6a8] sm:$0xf]
    %v727 = vld [vmem:[%s1 + $0x6ac] sm:$0xf]
    %v728 = vld [vmem:[%s1 + $0x6b0] sm:$0xf]
    %v729 = vld [vmem:[%s1 + $0x6b4] sm:$0xf]
    %v730 = vld [vmem:[%s1 + $0x6b8] sm:$0xf]
    %v731 = vld [vmem:[%s1 + $0x6bc] sm:$0xf]
    %v732 = vld [vmem:[%s1 + $0x6c0] sm:$0xf]
    %v733 = vld [vmem:[%s1 + $0x6c4] sm:$0xf]
    %v734 = vld [vmem:[%s1 + $0x6c8] sm:$0xf]
    %v735 = vld [vmem:[%s1 + $0x6cc] sm:$0xf]
    %v736 = vld [vmem:[%s1 + $0x6d0] sm:$0xf]
    %v737 = vld [vmem:[%s1 + $0x6d4] sm:$0xf]
    %v738 = vld [vmem:[%s1 + $0x6d8] sm:$0xf]
    %v739 = vld [vmem:[%s1 + $0x6dc] sm:$0xf]
    %v740 = vld [vmem:[%s1 + $0x6e0] sm:$0xf]
    %v741 = vld [vmem:[%s1 + $0x6e4] sm:$0xf]
    %v742 = vld [vmem:[%s1 + $0x6e8] sm:$0xf]
    %v743 = vld [vmem:[%s1 + $0x6ec] sm:$0xf]
    %v744 = vld [vmem:[%s1 + $0x6f0] sm:$0xf]
    %v745 = vld [vmem:[%s1 + $0x6f4] sm:$0xf]
    %v746 = vld [vmem:[%s1 + $0x6f8] sm:$0xf]
    %v747 = vld [vmem:[%s1 + $0x6fc] sm:$0xf]
    %v748 = vld [vmem:[%s1 + $0x700] sm:$0xf]
    %v749 = vld [vmem:[%s1 + $0x704] sm:$0xf]
    %v750 = vld [vmem:[%s1 + $0x708] sm:$0xf]
    %v751 = vld [vmem:[%s1 + $0x70c] sm:$0xf]
    %v752 = vld [vmem:[%s1 + $0x710] sm:$0xf]
    %v753 = vld [vmem:[%s1 + $0x714] sm:$0xf]
    %v754 = vld [vmem:[%s1 + $0x718] sm:$0xf]
    %v755 = vld [vmem:[%s1 + $0x71c] sm:$0xf]
    %v756 = vld [vmem:[%s1 + $0x720] sm:$0xf]
    %v757 = vld [vmem:[%s1 + $0x724] sm:$0xf]
    %v758 = vld [vmem:[%s1 + $0x728] sm:$0xf]
    %v759 = vld [vmem:[%s1 + $0x72c] sm:$0xf]
    %v760 = vld [vmem:[%s1 + $0x730] sm:$0xf]
    %v761 = vld [vmem:[%s1 + $0x734] sm:$0xf]
    %v762 = vld [vmem:[%s1 + $0x738] sm:$0xf]
    %v763 = vld [vmem:[%s1 + $0x73c] sm:$0xf]
    %v764 = vld [vmem:[%s1 + $0x740] sm:$0xf]
    %v765 = vld [vmem:[%s1 + $0x744] sm:$0xf]
    %v766 = vld [vmem:[%s1 + $0x748] sm:$0xf]
    %v767 = vld [vmem:[%s1 + $0x74c] sm:$0xf]
    %v768 = vld [vmem:[%s1 + $0x750] sm:$0xf]
    %v769 = vld [vmem:[%s1 + $0x754] sm:$0xf]
    %v770 = vld [vmem:[%s1 + $0x758] sm:$0xf]
    %v771 = vld [vmem:[%s1 + $0x75c] sm:$0xf]
    %v772 = vld [vmem:[%s1 + $0x760] sm:$0xf]
    %v773 = vld [vmem:[%s1 + $0x764] sm:$0xf]
    %v774 = vld [vmem:[%s1 + $0x768] sm:$0xf]
    %v775 = vld [vmem:[%s1 + $0x76c] sm:$0xf]
    %v776 = vld [vmem:[%s1 + $0x770] sm:$0xf]
    %v777 = vld [vmem:[%s1 + $0x774] sm:$0xf]
    %v778 = vld [vmem:[%s1 + $0x778] sm:$0xf]
    %v779 = vld [vmem:[%s1 + $0x77c] sm:$0xf]
    %v780 = vld [vmem:[%s1 + $0x780] sm:$0xf]
    %v781 = vld [vmem:[%s1 + $0x784] sm:$0xf]
    %v782 = vld [vmem:[%s1 + $0x788] sm:$0xf]
    %v783 = vld [vmem:[%s1 + $0x78c] sm:$0xf]
    %v784 = vld [vmem:[%s1 + $0x790] sm:$0xf]
    %v785 = vld [vmem:[%s1 + $0x794] sm:$0xf]
    %v786 = vld [vmem:[%s1 + $0x798] sm:$0xf]
    %v787 = vld [vmem:[%s1 + $0x79c] sm:$0xf]
    %v788 = vld [vmem:[%s1 + $0x7a0] sm:$0xf]
    %v789 = vld [vmem:[%s1 + $0x7a4] sm:$0xf]
    %v790 = vld [vmem:[%s1 + $0x7a8] sm:$0xf]
    %v791 = vld [vmem:[%s1 + $0x7ac] sm:$0xf]
    %v792 = vld [vmem:[%s1 + $0x7b0] sm:$0xf]
    %v793 = vld [vmem:[%s1 + $0x7b4] sm:$0xf]
    %v794 = vld [vmem:[%s1 + $0x7b8] sm:$0xf]
    %v795 = vld [vmem:[%s1 + $0x7bc] sm:$0xf]
    %v796 = vld [vmem:[%s1 + $0x7c0] sm:$0xf]
    %v797 = vld [vmem:[%s1 + $0x7c4] sm:$0xf]
    %v798 = vld [vmem:[%s1 + $0x7c8] sm:$0xf]
    %v799 = vld [vmem:[%s1 + $0x7cc] sm:$0xf]
    %v800 = vld [vmem:[%s1 + $0x7d0] sm:$0xf]
    %v801 = vld [vmem:[%s1 + $0x7d4] sm:$0xf]
    %v802 = vld [vmem:[%s1 + $0x7d8] sm:$0xf]
    %v803 = vld [vmem:[%s1 + $0x7dc] sm:$0xf]
    %v804 = vld [vmem:[%s1 + $0x7e0] sm:$0xf]
    %v805 = vld [vmem:[%s1 + $0x7e4] sm:$0xf]
    %v806 = vld [vmem:[%s1 + $0x7e8] sm:$0xf]
    %v807 = vld [vmem:[%s1 + $0x7ec] sm:$0xf]
    %v808 = vld [vmem:[%s1 + $0x7f0] sm:$0xf]
    %v809 = vld [vmem:[%s1 + $0x7f4] sm:$0xf]
    %v810 = vld [vmem:[%s1 + $0x7f8] sm:$0xf]
    %v811 = vld [vmem:[%s1 + $0x7fc] sm:$0xf]
    %v812 = vld [vmem:[%s1 + $0x800] sm:$0xf]
    %v813 = vld [vmem:[%s1 + $0x804] sm:$0xf]
    %v814 = vld [vmem:[%s1 + $0x808] sm:$0xf]
    %v815 = vld [vmem:[%s1 + $0x80c] sm:$0xf]
    %v816 = vld [vmem:[%s1 + $0x810] sm:$0xf]
    %v817 = vld [vmem:[%s1 + $0x814] sm:$0xf]
    %v818 = vld [vmem:[%s1 + $0x818] sm:$0xf]
    %v819 = vld [vmem:[%s1 + $0x81c] sm:$0xf]
    %v820 = vld [vmem:[%s1 + $0x820] sm:$0xf]
    %v821 = vld [vmem:[%s1 + $0x824] sm:$0xf]
    %v822 = vld [vmem:[%s1 + $0x828] sm:$0xf]
    %v823 = vld [vmem:[%s1 + $0x82c] sm:$0xf]
    %v824 = vld [vmem:[%s1 + $0x830] sm:$0xf]
    %v825 = vld [vmem:[%s1 + $0x834] sm:$0xf]
    %v826 = vld [vmem:[%s1 + $0x838] sm:$0xf]
    %v827 = vld [vmem:[%s1 + $0x83c] sm:$0xf]
    %v828 = vld [vmem:[%s1 + $0x840] sm:$0xf]
    %v829 = vld [vmem:[%s1 + $0x844] sm:$0xf]
    %v830 = vld [vmem:[%s1 + $0x848] sm:$0xf]
    %v831 = vld [vmem:[%s1 + $0x84c] sm:$0xf]
    %v832 = vld [vmem:[%s1 + $0x850] sm:$0xf]
    %v833 = vld [vmem:[%s1 + $0x854] sm:$0xf]
    %v834 = vld [vmem:[%s1 + $0x858] sm:$0xf]
    %v835 = vld [vmem:[%s1 + $0x85c] sm:$0xf]
    %v836 = vld [vmem:[%s1 + $0x860] sm:$0xf]
    %v837 = vld [vmem:[%s1 + $0x864] sm:$0xf]
    %v838 = vld [vmem:[%s1 + $0x868] sm:$0xf]
    %v839 = vld [vmem:[%s1 + $0x86c] sm:$0xf]
    %v840 = vld [vmem:[%s1 + $0x870] sm:$0xf]
    %v841 = vld [vmem:[%s1 + $0x874] sm:$0xf]
    %v842 = vld [vmem:[%s1 + $0x878] sm:$0xf]
    %v843 = vld [vmem:[%s1 + $0x87c] sm:$0xf]
    %v844 = vld [vmem:[%s1 + $0x880] sm:$0xf]
    %v845 = vld [vmem:[%s1 + $0x884] sm:$0xf]
    %v846 = vld [vmem:[%s1 + $0x888] sm:$0xf]
    %v847 = vld [vmem:[%s1 + $0x88c] sm:$0xf]
    %v848 = vld [vmem:[%s1 + $0x890] sm:$0xf]
    %v849 = vld [vmem:[%s1 + $0x894] sm:$0xf]
    %v850 = vld [vmem:[%s1 + $0x898] sm:$0xf]
    %v851 = vld [vmem:[%s1 + $0x89c] sm:$0xf]
    %v852 = vld [vmem:[%s1 + $0x8a0] sm:$0xf]
    %v853 = vld [vmem:[%s1 + $0x8a4] sm:$0xf]
    %v854 = vld [vmem:[%s1 + $0x8a8] sm:$0xf]
    %v855 = vld [vmem:[%s1 + $0x8ac] sm:$0xf]
    %v856 = vld [vmem:[%s1 + $0x8b0] sm:$0xf]
    %v857 = vld [vmem:[%s1 + $0x8b4] sm:$0xf]
    %v858 = vld [vmem:[%s1 + $0x8b8] sm:$0xf]
    %v859 = vld [vmem:[%s1 + $0x8bc] sm:$0xf]
    %v860 = vld [vmem:[%s1 + $0x8c0] sm:$0xf]
    %v861 = vld [vmem:[%s1 + $0x8c4] sm:$0xf]
    %v862 = vld [vmem:[%s1 + $0x8c8] sm:$0xf]
    %v863 = vld [vmem:[%s1 + $0x8cc] sm:$0xf]
    %v864 = vld [vmem:[%s1 + $0x8d0] sm:$0xf]
    %v865 = vld [vmem:[%s1 + $0x8d4] sm:$0xf]
    %v866 = vld [vmem:[%s1 + $0x8d8] sm:$0xf]
    %v867 = vld [vmem:[%s1 + $0x8dc] sm:$0xf]
    %v868 = vld [vmem:[%s1 + $0x8e0] sm:$0xf]
    %v869 = vld [vmem:[%s1 + $0x8e4] sm:$0xf]
    %v870 = vld [vmem:[%s1 + $0x8e8] sm:$0xf]
    %v871 = vld [vmem:[%s1 + $0x8ec] sm:$0xf]
    %v872 = vld [vmem:[%s1 + $0x8f0] sm:$0xf]
    %v873 = vld [vmem:[%s1 + $0x8f4] sm:$0xf]
    %v874 = vld [vmem:[%s1 + $0x8f8] sm:$0xf]
    %v875 = vld [vmem:[%s1 + $0x8fc] sm:$0xf]
    %v876 = vld [vmem:[%s1 + $0x900] sm:$0xf]
    %v877 = vld [vmem:[%s1 + $0x904] sm:$0xf]
    %v878 = vld [vmem:[%s1 + $0x908] sm:$0xf]
    %v879 = vld [vmem:[%s1 + $0x90c] sm:$0xf]
    %v880 = vld [vmem:[%s1 + $0x910] sm:$0xf]
    %v881 = vld [vmem:[%s1 + $0x914] sm:$0xf]
    %v882 = vld [vmem:[%s1 + $0x918] sm:$0xf]
    %v883 = vld [vmem:[%s1 + $0x91c] sm:$0xf]
    %v884 = vld [vmem:[%s1 + $0x920] sm:$0xf]
    %v885 = vld [vmem:[%s1 + $0x924] sm:$0xf]
    %v886 = vld [vmem:[%s1 + $0x928] sm:$0xf]
    %v887 = vld [vmem:[%s1 + $0x92c] sm:$0xf]
    %v888 = vld [vmem:[%s1 + $0x930] sm:$0xf]
    %v889 = vld [vmem:[%s1 + $0x934] sm:$0xf]
    %v890 = vld [vmem:[%s1 + $0x938] sm:$0xf]
    %v891 = vld [vmem:[%s1 + $0x93c] sm:$0xf]
    %v892 = vld [vmem:[%s1 + $0x940] sm:$0xf]
    %v893 = vld [vmem:[%s1 + $0x944] sm:$0xf]
    %v894 = vld [vmem:[%s1 + $0x948] sm:$0xf]
    %v895 = vld [vmem:[%s1 + $0x94c] sm:$0xf]
    %v896 = vld [vmem:[%s1 + $0x950] sm:$0xf]
    %v897 = vld [vmem:[%s1 + $0x954] sm:$0xf]
    %v898 = vld [vmem:[%s1 + $0x958] sm:$0xf]
    %v899 = vld [vmem:[%s1 + $0x95c] sm:$0xf]
    %v900 = vld [vmem:[%s1 + $0x960] sm:$0xf]
    %v901 = vld [vmem:[%s1 + $0x964] sm:$0xf]
    %v902 = vld [vmem:[%s1 + $0x968] sm:$0xf]
    %v903 = vld [vmem:[%s1 + $0x96c] sm:$0xf]
    %v904 = vld [vmem:[%s1 + $0x970] sm:$0xf]
    %v905 = vld [vmem:[%s1 + $0x974] sm:$0xf]
    %v906 = vld [vmem:[%s1 + $0x978] sm:$0xf]
    %v907 = vld [vmem:[%s1 + $0x97c] sm:$0xf]
    %v908 = vld [vmem:[%s1 + $0x980] sm:$0xf]
    %v909 = vld [vmem:[%s1 + $0x984] sm:$0xf]
    %v910 = vld [vmem:[%s1 + $0x988] sm:$0xf]
    %v911 = vld [vmem:[%s1 + $0x98c] sm:$0xf]
    %v912 = vld [vmem:[%s1 + $0x990] sm:$0xf]
    %v913 = vld [vmem:[%s1 + $0x994] sm:$0xf]
    %v914 = vld [vmem:[%s1 + $0x998] sm:$0xf]
    %v915 = vld [vmem:[%s1 + $0x99c] sm:$0xf]
    %v916 = vld [vmem:[%s1 + $0x9a0] sm:$0xf]
    %v917 = vld [vmem:[%s1 + $0x9a4] sm:$0xf]
    %v918 = vld [vmem:[%s1 + $0x9a8] sm:$0xf]
    %v919 = vld [vmem:[%s1 + $0x9ac] sm:$0xf]
    %v920 = vld [vmem:[%s1 + $0x9b0] sm:$0xf]
    %v921 = vld [vmem:[%s1 + $0x9b4] sm:$0xf]
    %v922 = vld [vmem:[%s1 + $0x9b8] sm:$0xf]
    %v923 = vld [vmem:[%s1 + $0x9bc] sm:$0xf]
    %v924 = vld [vmem:[%s1 + $0x9c0] sm:$0xf]
    %v925 = vld [vmem:[%s1 + $0x9c4] sm:$0xf]
    %v926 = vld [vmem:[%s1 + $0x9c8] sm:$0xf]
    %v927 = vld [vmem:[%s1 + $0x9cc] sm:$0xf]
    %v928 = vld [vmem:[%s1 + $0x9d0] sm:$0xf]
    %v929 = vld [vmem:[%s1 + $0x9d4] sm:$0xf]
    %v930 = vld [vmem:[%s1 + $0x9d8] sm:$0xf]
    %v931 = vld [vmem:[%s1 + $0x9dc] sm:$0xf]
    %v932 = vld [vmem:[%s1 + $0x9e0] sm:$0xf]
    %v933 = vld [vmem:[%s1 + $0x9e4] sm:$0xf]
    %v934 = vld [vmem:[%s1 + $0x9e8] sm:$0xf]
    %v935 = vld [vmem:[%s1 + $0x9ec] sm:$0xf]
    %v936 = vld [vmem:[%s1 + $0x9f0] sm:$0xf]
    %v937 = vld [vmem:[%s1 + $0x9f4] sm:$0xf]
    %v938 = vld [vmem:[%s1 + $0x9f8] sm:$0xf]
    %v939 = vld [vmem:[%s1 + $0x9fc] sm:$0xf]
    %v940 = vld [vmem:[%s1 + $0xa00] sm:$0xf]
    %v941 = vld [vmem:[%s1 + $0xa04] sm:$0xf]
    %v942 = vld [vmem:[%s1 + $0xa08] sm:$0xf]
    %v943 = vld [vmem:[%s1 + $0xa0c] sm:$0xf]
    %v944 = vld [vmem:[%s1 + $0xa10] sm:$0xf]
    %v945 = vld [vmem:[%s1 + $0xa14] sm:$0xf]
    %v946 = vld [vmem:[%s1 + $0xa18] sm:$0xf]
    %v947 = vld [vmem:[%s1 + $0xa1c] sm:$0xf]
    %v948 = vld [vmem:[%s1 + $0xa20] sm:$0xf]
    %v949 = vld [vmem:[%s1 + $0xa24] sm:$0xf]
    %v950 = vld [vmem:[%s1 + $0xa28] sm:$0xf]
    %v951 = vld [vmem:[%s1 + $0xa2c] sm:$0xf]
    %v952 = vld [vmem:[%s1 + $0xa30] sm:$0xf]
    %v953 = vld [vmem:[%s1 + $0xa34] sm:$0xf]
    %v954 = vld [vmem:[%s1 + $0xa38] sm:$0xf]
    %v955 = vld [vmem:[%s1 + $0xa3c] sm:$0xf]
    %v956 = vld [vmem:[%s1 + $0xa40] sm:$0xf]
    %v957 = vld [vmem:[%s1 + $0xa44] sm:$0xf]
    %v958 = vld [vmem:[%s1 + $0xa48] sm:$0xf]
    %v959 = vld [vmem:[%s1 + $0xa4c] sm:$0xf]
    %v960 = vld [vmem:[%s1 + $0xa50] sm:$0xf]
    %v961 = vld [vmem:[%s1 + $0xa54] sm:$0xf]
    %v962 = vld [vmem:[%s1 + $0xa58] sm:$0xf]
    %v963 = vld [vmem:[%s1 + $0xa5c] sm:$0xf]
    %v964 = vld [vmem:[%s1 + $0xa60] sm:$0xf]
    %v965 = vld [vmem:[%s1 + $0xa64] sm:$0xf]
    %v966 = vld [vmem:[%s1 + $0xa68] sm:$0xf]
    %v967 = vld [vmem:[%s1 + $0xa6c] sm:$0xf]
    %v968 = vld [vmem:[%s1 + $0xa70] sm:$0xf]
    %v969 = vld [vmem:[%s1 + $0xa74] sm:$0xf]
    %v970 = vld [vmem:[%s1 + $0xa78] sm:$0xf]
    %v971 = vld [vmem:[%s1 + $0xa7c] sm:$0xf]
    %v972 = vld [vmem:[%s2] sm:$0x1]
    %v974 = vlaneseq
    %v975 = vshrl.u32 %v974, 7
    %v976 = vsub.s32 0, %v975
    %v977 = vrot.slane %v972, %v976
    %v1651 = vunpack.c.l.b16 %v300
    %v1652 = vunpack.c.l.b16 %v301
    %v1653 = vunpack.c.l.b16 %v302
    %v1654 = vunpack.c.l.b16 %v303
    %v1655 = vunpack.c.l.b16 %v304
    %v1656 = vunpack.c.l.b16 %v305
    %v1657 = vunpack.c.l.b16 %v306
    %v1658 = vunpack.c.l.b16 %v307
    %v1659 = vunpack.c.l.b16 %v308
    %v1660 = vunpack.c.l.b16 %v309
    %v1661 = vunpack.c.l.b16 %v310
    %v1662 = vunpack.c.l.b16 %v311
    %v1663 = vunpack.c.l.b16 %v312
    %v1664 = vunpack.c.l.b16 %v313
    %v1665 = vunpack.c.l.b16 %v314
    %v1666 = vunpack.c.l.b16 %v315
    %v1667 = vunpack.c.l.b16 %v316
    %v1668 = vunpack.c.l.b16 %v317
    %v1669 = vunpack.c.l.b16 %v318
    %v1670 = vunpack.c.l.b16 %v319
    %v1671 = vunpack.c.l.b16 %v320
    %v1672 = vunpack.c.l.b16 %v321
    %v1673 = vunpack.c.l.b16 %v322
    %v1674 = vunpack.c.l.b16 %v323
    %v1675 = vunpack.c.l.b16 %v324
    %v1676 = vunpack.c.l.b16 %v325
    %v1677 = vunpack.c.l.b16 %v326
    %v1678 = vunpack.c.l.b16 %v327
    %v1679 = vunpack.c.l.b16 %v328
    %v1680 = vunpack.c.l.b16 %v329
    %v1681 = vunpack.c.l.b16 %v330
    %v1682 = vunpack.c.l.b16 %v331
    %v1683 = vunpack.c.l.b16 %v332
    %v1684 = vunpack.c.l.b16 %v333
    %v1685 = vunpack.c.l.b16 %v334
    %v1686 = vunpack.c.l.b16 %v335
    %v1687 = vunpack.c.l.b16 %v336
    %v1688 = vunpack.c.l.b16 %v337
    %v1689 = vunpack.c.l.b16 %v338
    %v1690 = vunpack.c.l.b16 %v339
    %v1691 = vunpack.c.l.b16 %v340
    %v1692 = vunpack.c.l.b16 %v341
    %v1693 = vunpack.c.l.b16 %v342
    %v1694 = vunpack.c.l.b16 %v343
    %v1695 = vunpack.c.l.b16 %v344
    %v1696 = vunpack.c.l.b16 %v345
    %v1697 = vunpack.c.l.b16 %v346
    %v1698 = vunpack.c.l.b16 %v347
    %v1699 = vunpack.c.l.b16 %v348
    %v1700 = vunpack.c.l.b16 %v349
    %v1701 = vunpack.c.l.b16 %v350
    %v1702 = vunpack.c.l.b16 %v351
    %v1703 = vunpack.c.l.b16 %v352
    %v1704 = vunpack.c.l.b16 %v353
    %v1705 = vunpack.c.l.b16 %v354
    %v1706 = vunpack.c.l.b16 %v355
    %v1707 = vunpack.c.l.b16 %v356
    %v1708 = vunpack.c.l.b16 %v357
    %v1709 = vunpack.c.l.b16 %v358
    %v1710 = vunpack.c.l.b16 %v359
    %v1711 = vunpack.c.l.b16 %v360
    %v1712 = vunpack.c.l.b16 %v361
    %v1713 = vunpack.c.l.b16 %v362
    %v1714 = vunpack.c.l.b16 %v363
    %v1715 = vunpack.c.l.b16 %v364
    %v1716 = vunpack.c.l.b16 %v365
    %v1717 = vunpack.c.l.b16 %v366
    %v1718 = vunpack.c.l.b16 %v367
    %v1719 = vunpack.c.l.b16 %v368
    %v1720 = vunpack.c.l.b16 %v369
    %v1721 = vunpack.c.l.b16 %v370
    %v1722 = vunpack.c.l.b16 %v371
    %v1723 = vunpack.c.l.b16 %v372
    %v1724 = vunpack.c.l.b16 %v373
    %v1725 = vunpack.c.l.b16 %v374
    %v1726 = vunpack.c.l.b16 %v375
    %v1727 = vunpack.c.l.b16 %v376
    %v1728 = vunpack.c.l.b16 %v377
    %v1729 = vunpack.c.l.b16 %v378
    %v1730 = vunpack.c.l.b16 %v379
    %v1731 = vunpack.c.l.b16 %v380
    %v1732 = vunpack.c.l.b16 %v381
    %v1733 = vunpack.c.l.b16 %v382
    %v1734 = vunpack.c.l.b16 %v383
    %v1735 = vunpack.c.l.b16 %v384
    %v1736 = vunpack.c.l.b16 %v385
    %v1737 = vunpack.c.l.b16 %v386
    %v1738 = vunpack.c.l.b16 %v387
    %v1739 = vunpack.c.l.b16 %v388
    %v1740 = vunpack.c.l.b16 %v389
    %v1741 = vunpack.c.l.b16 %v390
    %v1742 = vunpack.c.l.b16 %v391
    %v1743 = vunpack.c.l.b16 %v392
    %v1744 = vunpack.c.l.b16 %v393
    %v1745 = vunpack.c.l.b16 %v394
    %v1746 = vunpack.c.l.b16 %v395
    %v1747 = vunpack.c.l.b16 %v396
    %v1748 = vunpack.c.l.b16 %v397
    %v1749 = vunpack.c.l.b16 %v398
    %v1750 = vunpack.c.l.b16 %v399
    %v1751 = vunpack.c.l.b16 %v400
    %v1752 = vunpack.c.l.b16 %v401
    %v1753 = vunpack.c.l.b16 %v402
    %v1754 = vunpack.c.l.b16 %v403
    %v1755 = vunpack.c.l.b16 %v404
    %v1756 = vunpack.c.l.b16 %v405
    %v1757 = vunpack.c.l.b16 %v406
    %v1758 = vunpack.c.l.b16 %v407
    %v1759 = vunpack.c.l.b16 %v408
    %v1760 = vunpack.c.l.b16 %v409
    %v1761 = vunpack.c.l.b16 %v410
    %v1762 = vunpack.c.l.b16 %v411
    %v1763 = vunpack.c.l.b16 %v412
    %v1764 = vunpack.c.l.b16 %v413
    %v1765 = vunpack.c.l.b16 %v414
    %v1766 = vunpack.c.l.b16 %v415
    %v1767 = vunpack.c.l.b16 %v416
    %v1768 = vunpack.c.l.b16 %v417
    %v1769 = vunpack.c.l.b16 %v418
    %v1770 = vunpack.c.l.b16 %v419
    %v1771 = vunpack.c.l.b16 %v420
    %v1772 = vunpack.c.l.b16 %v421
    %v1773 = vunpack.c.l.b16 %v422
    %v1774 = vunpack.c.l.b16 %v423
    %v1775 = vunpack.c.l.b16 %v424
    %v1776 = vunpack.c.l.b16 %v425
    %v1777 = vunpack.c.l.b16 %v426
    %v1778 = vunpack.c.l.b16 %v427
    %v1779 = vunpack.c.l.b16 %v428
    %v1780 = vunpack.c.l.b16 %v429
    %v1781 = vunpack.c.l.b16 %v430
    %v1782 = vunpack.c.l.b16 %v431
    %v1783 = vunpack.c.l.b16 %v432
    %v1784 = vunpack.c.l.b16 %v433
    %v1785 = vunpack.c.l.b16 %v434
    %v1786 = vunpack.c.l.b16 %v435
    %v1787 = vunpack.c.l.b16 %v436
    %v1788 = vunpack.c.l.b16 %v437
    %v1789 = vunpack.c.l.b16 %v438
    %v1790 = vunpack.c.l.b16 %v439
    %v1791 = vunpack.c.l.b16 %v440
    %v1792 = vunpack.c.l.b16 %v441
    %v1793 = vunpack.c.l.b16 %v442
    %v1794 = vunpack.c.l.b16 %v443
    %v1795 = vunpack.c.l.b16 %v444
    %v1796 = vunpack.c.l.b16 %v445
    %v1797 = vunpack.c.l.b16 %v446
    %v1798 = vunpack.c.l.b16 %v447
    %v1799 = vunpack.c.l.b16 %v448
    %v1800 = vunpack.c.l.b16 %v449
    %v1801 = vunpack.c.l.b16 %v450
    %v1802 = vunpack.c.l.b16 %v451
    %v1803 = vunpack.c.l.b16 %v452
    %v1804 = vunpack.c.l.b16 %v453
    %v1805 = vunpack.c.l.b16 %v454
    %v1806 = vunpack.c.l.b16 %v455
    %v1807 = vunpack.c.l.b16 %v456
    %v1808 = vunpack.c.l.b16 %v457
    %v1809 = vunpack.c.l.b16 %v458
    %v1810 = vunpack.c.l.b16 %v459
    %v1811 = vunpack.c.l.b16 %v460
    %v1812 = vunpack.c.l.b16 %v461
    %v1813 = vunpack.c.l.b16 %v462
    %v1814 = vunpack.c.l.b16 %v463
    %v1815 = vunpack.c.l.b16 %v464
    %v1816 = vunpack.c.l.b16 %v465
    %v1817 = vunpack.c.l.b16 %v466
    %v1818 = vunpack.c.l.b16 %v467
    %v1819 = vunpack.c.l.b16 %v468
    %v1820 = vunpack.c.l.b16 %v469
    %v1821 = vunpack.c.l.b16 %v470
    %v1822 = vunpack.c.l.b16 %v471
    %v1823 = vunpack.c.l.b16 %v472
    %v1824 = vunpack.c.l.b16 %v473
    %v1825 = vunpack.c.l.b16 %v474
    %v1826 = vunpack.c.l.b16 %v475
    %v1827 = vunpack.c.l.b16 %v476
    %v1828 = vunpack.c.l.b16 %v477
    %v1829 = vunpack.c.l.b16 %v478
    %v1830 = vunpack.c.l.b16 %v479
    %v1831 = vunpack.c.l.b16 %v480
    %v1832 = vunpack.c.l.b16 %v481
    %v1833 = vunpack.c.l.b16 %v482
    %v1834 = vunpack.c.l.b16 %v483
    %v1835 = vunpack.c.l.b16 %v484
    %v1836 = vunpack.c.l.b16 %v485
    %v1837 = vunpack.c.l.b16 %v486
    %v1838 = vunpack.c.l.b16 %v487
    %v1839 = vunpack.c.l.b16 %v488
    %v1840 = vunpack.c.l.b16 %v489
    %v1841 = vunpack.c.l.b16 %v490
    %v1842 = vunpack.c.l.b16 %v491
    %v1843 = vunpack.c.l.b16 %v492
    %v1844 = vunpack.c.l.b16 %v493
    %v1845 = vunpack.c.l.b16 %v494
    %v1846 = vunpack.c.l.b16 %v495
    %v1847 = vunpack.c.l.b16 %v496
    %v1848 = vunpack.c.l.b16 %v497
    %v1849 = vunpack.c.l.b16 %v498
    %v1850 = vunpack.c.l.b16 %v499
    %v1851 = vunpack.c.l.b16 %v500
    %v1852 = vunpack.c.l.b16 %v501
    %v1853 = vunpack.c.l.b16 %v502
    %v1854 = vunpack.c.l.b16 %v503
    %v1855 = vunpack.c.l.b16 %v504
    %v1856 = vunpack.c.l.b16 %v505
    %v1857 = vunpack.c.l.b16 %v506
    %v1858 = vunpack.c.l.b16 %v507
    %v1859 = vunpack.c.l.b16 %v508
    %v1860 = vunpack.c.l.b16 %v509
    %v1861 = vunpack.c.l.b16 %v510
    %v1862 = vunpack.c.l.b16 %v511
    %v1863 = vunpack.c.l.b16 %v512
    %v1864 = vunpack.c.l.b16 %v513
    %v1865 = vunpack.c.l.b16 %v514
    %v1866 = vunpack.c.l.b16 %v515
    %v1867 = vunpack.c.l.b16 %v516
    %v1868 = vunpack.c.l.b16 %v517
    %v1869 = vunpack.c.l.b16 %v518
    %v1870 = vunpack.c.l.b16 %v519
    %v1871 = vunpack.c.l.b16 %v520
    %v1872 = vunpack.c.l.b16 %v521
    %v1873 = vunpack.c.l.b16 %v522
    %v1874 = vunpack.c.l.b16 %v523
    %v1875 = vunpack.c.l.b16 %v524
    %v1876 = vunpack.c.l.b16 %v525
    %v1877 = vunpack.c.l.b16 %v526
    %v1878 = vunpack.c.l.b16 %v527
    %v1879 = vunpack.c.l.b16 %v528
    %v1880 = vunpack.c.l.b16 %v529
    %v1881 = vunpack.c.l.b16 %v530
    %v1882 = vunpack.c.l.b16 %v531
    %v1883 = vunpack.c.l.b16 %v532
    %v1884 = vunpack.c.l.b16 %v533
    %v1885 = vunpack.c.l.b16 %v534
    %v1886 = vunpack.c.l.b16 %v535
    %v1887 = vunpack.c.l.b16 %v536
    %v1888 = vunpack.c.l.b16 %v537
    %v1889 = vunpack.c.l.b16 %v538
    %v1890 = vunpack.c.l.b16 %v539
    %v1891 = vunpack.c.l.b16 %v540
    %v1892 = vunpack.c.l.b16 %v541
    %v1893 = vunpack.c.l.b16 %v542
    %v1894 = vunpack.c.l.b16 %v543
    %v1895 = vunpack.c.l.b16 %v544
    %v1896 = vunpack.c.l.b16 %v545
    %v1897 = vunpack.c.l.b16 %v546
    %v1898 = vunpack.c.l.b16 %v547
    %v1899 = vunpack.c.l.b16 %v548
    %v1900 = vunpack.c.l.b16 %v549
    %v1901 = vunpack.c.l.b16 %v550
    %v1902 = vunpack.c.l.b16 %v551
    %v1903 = vunpack.c.l.b16 %v552
    %v1904 = vunpack.c.l.b16 %v553
    %v1905 = vunpack.c.l.b16 %v554
    %v1906 = vunpack.c.l.b16 %v555
    %v1907 = vunpack.c.l.b16 %v556
    %v1908 = vunpack.c.l.b16 %v557
    %v1909 = vunpack.c.l.b16 %v558
    %v1910 = vunpack.c.l.b16 %v559
    %v1911 = vunpack.c.l.b16 %v560
    %v1912 = vunpack.c.l.b16 %v561
    %v1913 = vunpack.c.l.b16 %v562
    %v1914 = vunpack.c.l.b16 %v563
    %v1915 = vunpack.c.l.b16 %v564
    %v1916 = vunpack.c.l.b16 %v565
    %v1917 = vunpack.c.l.b16 %v566
    %v1918 = vunpack.c.l.b16 %v567
    %v1919 = vunpack.c.l.b16 %v568
    %v1920 = vunpack.c.l.b16 %v569
    %v1921 = vunpack.c.l.b16 %v570
    %v1922 = vunpack.c.l.b16 %v571
    %v1923 = vunpack.c.l.b16 %v572
    %v1924 = vunpack.c.l.b16 %v573
    %v1925 = vunpack.c.l.b16 %v574
    %v1926 = vunpack.c.l.b16 %v575
    %v1927 = vunpack.c.l.b16 %v576
    %v1928 = vunpack.c.l.b16 %v577
    %v1929 = vunpack.c.l.b16 %v578
    %v1930 = vunpack.c.l.b16 %v579
    %v1931 = vunpack.c.l.b16 %v580
    %v1932 = vunpack.c.l.b16 %v581
    %v1933 = vunpack.c.l.b16 %v582
    %v1934 = vunpack.c.l.b16 %v583
    %v1935 = vunpack.c.l.b16 %v584
    %v1936 = vunpack.c.l.b16 %v585
    %v1937 = vunpack.c.l.b16 %v586
    %v1938 = vunpack.c.l.b16 %v587
    %v1939 = vunpack.c.l.b16 %v588
    %v1940 = vunpack.c.l.b16 %v589
    %v1941 = vunpack.c.l.b16 %v590
    %v1942 = vunpack.c.l.b16 %v591
    %v1943 = vunpack.c.l.b16 %v592
    %v1944 = vunpack.c.l.b16 %v593
    %v1945 = vunpack.c.l.b16 %v594
    %v1946 = vunpack.c.l.b16 %v595
    %v1947 = vunpack.c.l.b16 %v596
    %v1948 = vunpack.c.l.b16 %v597
    %v1949 = vunpack.c.l.b16 %v598
    %v1950 = vunpack.c.l.b16 %v599
    %v1951 = vunpack.c.l.b16 %v600
    %v1952 = vunpack.c.l.b16 %v601
    %v1953 = vunpack.c.l.b16 %v602
    %v1954 = vunpack.c.l.b16 %v603
    %v1955 = vunpack.c.l.b16 %v604
    %v1956 = vunpack.c.l.b16 %v605
    %v1957 = vunpack.c.l.b16 %v606
    %v1958 = vunpack.c.l.b16 %v607
    %v1959 = vunpack.c.l.b16 %v608
    %v1960 = vunpack.c.l.b16 %v609
    %v1961 = vunpack.c.l.b16 %v610
    %v1962 = vunpack.c.l.b16 %v611
    %v1963 = vunpack.c.l.b16 %v612
    %v1964 = vunpack.c.l.b16 %v613
    %v1965 = vunpack.c.l.b16 %v614
    %v1966 = vunpack.c.l.b16 %v615
    %v1967 = vunpack.c.l.b16 %v616
    %v1968 = vunpack.c.l.b16 %v617
    %v1969 = vunpack.c.l.b16 %v618
    %v1970 = vunpack.c.l.b16 %v619
    %v1971 = vunpack.c.l.b16 %v620
    %v1972 = vunpack.c.l.b16 %v621
    %v1973 = vunpack.c.l.b16 %v622
    %v1974 = vunpack.c.l.b16 %v623
    %v1975 = vunpack.c.l.b16 %v624
    %v1976 = vunpack.c.l.b16 %v625
    %v1977 = vunpack.c.l.b16 %v626
    %v1978 = vunpack.c.l.b16 %v627
    %v1979 = vunpack.c.l.b16 %v628
    %v1980 = vunpack.c.l.b16 %v629
    %v1981 = vunpack.c.l.b16 %v630
    %v1982 = vunpack.c.l.b16 %v631
    %v1983 = vunpack.c.l.b16 %v632
    %v1984 = vunpack.c.l.b16 %v633
    %v1985 = vunpack.c.l.b16 %v634
    %v1986 = vunpack.c.l.b16 %v635
    %v1987 = vunpack.c.l.b16 %v636
    %v1988 = vunpack.c.l.b16 %v637
    %v1989 = vunpack.c.l.b16 %v638
    %v1990 = vunpack.c.l.b16 %v639
    %v1991 = vunpack.c.l.b16 %v640
    %v1992 = vunpack.c.l.b16 %v641
    %v1993 = vunpack.c.l.b16 %v642
    %v1994 = vunpack.c.l.b16 %v643
    %v1995 = vunpack.c.l.b16 %v644
    %v1996 = vunpack.c.l.b16 %v645
    %v1997 = vunpack.c.l.b16 %v646
    %v1998 = vunpack.c.l.b16 %v647
    %v1999 = vunpack.c.l.b16 %v648
    %v2000 = vunpack.c.l.b16 %v649
    %v2001 = vunpack.c.l.b16 %v650
    %v2002 = vunpack.c.l.b16 %v651
    %v2003 = vunpack.c.l.b16 %v652
    %v2004 = vunpack.c.l.b16 %v653
    %v2005 = vunpack.c.l.b16 %v654
    %v2006 = vunpack.c.l.b16 %v655
    %v2007 = vunpack.c.l.b16 %v656
    %v2008 = vunpack.c.l.b16 %v657
    %v2009 = vunpack.c.l.b16 %v658
    %v2010 = vunpack.c.l.b16 %v659
    %v2011 = vunpack.c.l.b16 %v660
    %v2012 = vunpack.c.l.b16 %v661
    %v2013 = vunpack.c.l.b16 %v662
    %v2014 = vunpack.c.l.b16 %v663
    %v2015 = vunpack.c.l.b16 %v664
    %v2016 = vunpack.c.l.b16 %v665
    %v2017 = vunpack.c.l.b16 %v666
    %v2018 = vunpack.c.l.b16 %v667
    %v2019 = vunpack.c.l.b16 %v668
    %v2020 = vunpack.c.l.b16 %v669
    %v2021 = vunpack.c.l.b16 %v670
    %v2022 = vunpack.c.l.b16 %v671
    %v2023 = vunpack.c.l.b16 %v672
    %v2024 = vunpack.c.l.b16 %v673
    %v2025 = vunpack.c.l.b16 %v674
    %v2026 = vunpack.c.l.b16 %v675
    %v2027 = vunpack.c.l.b16 %v676
    %v2028 = vunpack.c.l.b16 %v677
    %v2029 = vunpack.c.l.b16 %v678
    %v2030 = vunpack.c.l.b16 %v679
    %v2031 = vunpack.c.l.b16 %v680
    %v2032 = vunpack.c.l.b16 %v681
    %v2033 = vunpack.c.l.b16 %v682
    %v2034 = vunpack.c.l.b16 %v683
    %v2035 = vunpack.c.l.b16 %v684
    %v2036 = vunpack.c.l.b16 %v685
    %v2037 = vunpack.c.l.b16 %v686
    %v2038 = vunpack.c.l.b16 %v687
    %v2039 = vunpack.c.l.b16 %v688
    %v2040 = vunpack.c.l.b16 %v689
    %v2041 = vunpack.c.l.b16 %v690
    %v2042 = vunpack.c.l.b16 %v691
    %v2043 = vunpack.c.l.b16 %v692
    %v2044 = vunpack.c.l.b16 %v693
    %v2045 = vunpack.c.l.b16 %v694
    %v2046 = vunpack.c.l.b16 %v695
    %v2047 = vunpack.c.l.b16 %v696
    %v2048 = vunpack.c.l.b16 %v697
    %v2049 = vunpack.c.l.b16 %v698
    %v2050 = vunpack.c.l.b16 %v699
    %v2051 = vunpack.c.l.b16 %v700
    %v2052 = vunpack.c.l.b16 %v701
    %v2053 = vunpack.c.l.b16 %v702
    %v2054 = vunpack.c.l.b16 %v703
    %v2055 = vunpack.c.l.b16 %v704
    %v2056 = vunpack.c.l.b16 %v705
    %v2057 = vunpack.c.l.b16 %v706
    %v2058 = vunpack.c.l.b16 %v707
    %v2059 = vunpack.c.l.b16 %v708
    %v2060 = vunpack.c.l.b16 %v709
    %v2061 = vunpack.c.l.b16 %v710
    %v2062 = vunpack.c.l.b16 %v711
    %v2063 = vunpack.c.l.b16 %v712
    %v2064 = vunpack.c.l.b16 %v713
    %v2065 = vunpack.c.l.b16 %v714
    %v2066 = vunpack.c.l.b16 %v715
    %v2067 = vunpack.c.l.b16 %v716
    %v2068 = vunpack.c.l.b16 %v717
    %v2069 = vunpack.c.l.b16 %v718
    %v2070 = vunpack.c.l.b16 %v719
    %v2071 = vunpack.c.l.b16 %v720
    %v2072 = vunpack.c.l.b16 %v721
    %v2073 = vunpack.c.l.b16 %v722
    %v2074 = vunpack.c.l.b16 %v723
    %v2075 = vunpack.c.l.b16 %v724
    %v2076 = vunpack.c.l.b16 %v725
    %v2077 = vunpack.c.l.b16 %v726
    %v2078 = vunpack.c.l.b16 %v727
    %v2079 = vunpack.c.l.b16 %v728
    %v2080 = vunpack.c.l.b16 %v729
    %v2081 = vunpack.c.l.b16 %v730
    %v2082 = vunpack.c.l.b16 %v731
    %v2083 = vunpack.c.l.b16 %v732
    %v2084 = vunpack.c.l.b16 %v733
    %v2085 = vunpack.c.l.b16 %v734
    %v2086 = vunpack.c.l.b16 %v735
    %v2087 = vunpack.c.l.b16 %v736
    %v2088 = vunpack.c.l.b16 %v737
    %v2089 = vunpack.c.l.b16 %v738
    %v2090 = vunpack.c.l.b16 %v739
    %v2091 = vunpack.c.l.b16 %v740
    %v2092 = vunpack.c.l.b16 %v741
    %v2093 = vunpack.c.l.b16 %v742
    %v2094 = vunpack.c.l.b16 %v743
    %v2095 = vunpack.c.l.b16 %v744
    %v2096 = vunpack.c.l.b16 %v745
    %v2097 = vunpack.c.l.b16 %v746
    %v2098 = vunpack.c.l.b16 %v747
    %v2099 = vunpack.c.l.b16 %v748
    %v2100 = vunpack.c.l.b16 %v749
    %v2101 = vunpack.c.l.b16 %v750
    %v2102 = vunpack.c.l.b16 %v751
    %v2103 = vunpack.c.l.b16 %v752
    %v2104 = vunpack.c.l.b16 %v753
    %v2105 = vunpack.c.l.b16 %v754
    %v2106 = vunpack.c.l.b16 %v755
    %v2107 = vunpack.c.l.b16 %v756
    %v2108 = vunpack.c.l.b16 %v757
    %v2109 = vunpack.c.l.b16 %v758
    %v2110 = vunpack.c.l.b16 %v759
    %v2111 = vunpack.c.l.b16 %v760
    %v2112 = vunpack.c.l.b16 %v761
    %v2113 = vunpack.c.l.b16 %v762
    %v2114 = vunpack.c.l.b16 %v763
    %v2115 = vunpack.c.l.b16 %v764
    %v2116 = vunpack.c.l.b16 %v765
    %v2117 = vunpack.c.l.b16 %v766
    %v2118 = vunpack.c.l.b16 %v767
    %v2119 = vunpack.c.l.b16 %v768
    %v2120 = vunpack.c.l.b16 %v769
    %v2121 = vunpack.c.l.b16 %v770
    %v2122 = vunpack.c.l.b16 %v771
    %v2123 = vunpack.c.l.b16 %v772
    %v2124 = vunpack.c.l.b16 %v773
    %v2125 = vunpack.c.l.b16 %v774
    %v2126 = vunpack.c.l.b16 %v775
    %v2127 = vunpack.c.l.b16 %v776
    %v2128 = vunpack.c.l.b16 %v777
    %v2129 = vunpack.c.l.b16 %v778
    %v2130 = vunpack.c.l.b16 %v779
    %v2131 = vunpack.c.l.b16 %v780
    %v2132 = vunpack.c.l.b16 %v781
    %v2133 = vunpack.c.l.b16 %v782
    %v2134 = vunpack.c.l.b16 %v783
    %v2135 = vunpack.c.l.b16 %v784
    %v2136 = vunpack.c.l.b16 %v785
    %v2137 = vunpack.c.l.b16 %v786
    %v2138 = vunpack.c.l.b16 %v787
    %v2139 = vunpack.c.l.b16 %v788
    %v2140 = vunpack.c.l.b16 %v789
    %v2141 = vunpack.c.l.b16 %v790
    %v2142 = vunpack.c.l.b16 %v791
    %v2143 = vunpack.c.l.b16 %v792
    %v2144 = vunpack.c.l.b16 %v793
    %v2145 = vunpack.c.l.b16 %v794
    %v2146 = vunpack.c.l.b16 %v795
    %v2147 = vunpack.c.l.b16 %v796
    %v2148 = vunpack.c.l.b16 %v797
    %v2149 = vunpack.c.l.b16 %v798
    %v2150 = vunpack.c.l.b16 %v799
    %v2151 = vunpack.c.l.b16 %v800
    %v2152 = vunpack.c.l.b16 %v801
    %v2153 = vunpack.c.l.b16 %v802
    %v2154 = vunpack.c.l.b16 %v803
    %v2155 = vunpack.c.l.b16 %v804
    %v2156 = vunpack.c.l.b16 %v805
    %v2157 = vunpack.c.l.b16 %v806
    %v2158 = vunpack.c.l.b16 %v807
    %v2159 = vunpack.c.l.b16 %v808
    %v2160 = vunpack.c.l.b16 %v809
    %v2161 = vunpack.c.l.b16 %v810
    %v2162 = vunpack.c.l.b16 %v811
    %v2163 = vunpack.c.l.b16 %v812
    %v2164 = vunpack.c.l.b16 %v813
    %v2165 = vunpack.c.l.b16 %v814
    %v2166 = vunpack.c.l.b16 %v815
    %v2167 = vunpack.c.l.b16 %v816
    %v2168 = vunpack.c.l.b16 %v817
    %v2169 = vunpack.c.l.b16 %v818
    %v2170 = vunpack.c.l.b16 %v819
    %v2171 = vunpack.c.l.b16 %v820
    %v2172 = vunpack.c.l.b16 %v821
    %v2173 = vunpack.c.l.b16 %v822
    %v2174 = vunpack.c.l.b16 %v823
    %v2175 = vunpack.c.l.b16 %v824
    %v2176 = vunpack.c.l.b16 %v825
    %v2177 = vunpack.c.l.b16 %v826
    %v2178 = vunpack.c.l.b16 %v827
    %v2179 = vunpack.c.l.b16 %v828
    %v2180 = vunpack.c.l.b16 %v829
    %v2181 = vunpack.c.l.b16 %v830
    %v2182 = vunpack.c.l.b16 %v831
    %v2183 = vunpack.c.l.b16 %v832
    %v2184 = vunpack.c.l.b16 %v833
    %v2185 = vunpack.c.l.b16 %v834
    %v2186 = vunpack.c.l.b16 %v835
    %v2187 = vunpack.c.l.b16 %v836
    %v2188 = vunpack.c.l.b16 %v837
    %v2189 = vunpack.c.l.b16 %v838
    %v2190 = vunpack.c.l.b16 %v839
    %v2191 = vunpack.c.l.b16 %v840
    %v2192 = vunpack.c.l.b16 %v841
    %v2193 = vunpack.c.l.b16 %v842
    %v2194 = vunpack.c.l.b16 %v843
    %v2195 = vunpack.c.l.b16 %v844
    %v2196 = vunpack.c.l.b16 %v845
    %v2197 = vunpack.c.l.b16 %v846
    %v2198 = vunpack.c.l.b16 %v847
    %v2199 = vunpack.c.l.b16 %v848
    %v2200 = vunpack.c.l.b16 %v849
    %v2201 = vunpack.c.l.b16 %v850
    %v2202 = vunpack.c.l.b16 %v851
    %v2203 = vunpack.c.l.b16 %v852
    %v2204 = vunpack.c.l.b16 %v853
    %v2205 = vunpack.c.l.b16 %v854
    %v2206 = vunpack.c.l.b16 %v855
    %v2207 = vunpack.c.l.b16 %v856
    %v2208 = vunpack.c.l.b16 %v857
    %v2209 = vunpack.c.l.b16 %v858
    %v2210 = vunpack.c.l.b16 %v859
    %v2211 = vunpack.c.l.b16 %v860
    %v2212 = vunpack.c.l.b16 %v861
    %v2213 = vunpack.c.l.b16 %v862
    %v2214 = vunpack.c.l.b16 %v863
    %v2215 = vunpack.c.l.b16 %v864
    %v2216 = vunpack.c.l.b16 %v865
    %v2217 = vunpack.c.l.b16 %v866
    %v2218 = vunpack.c.l.b16 %v867
    %v2219 = vunpack.c.l.b16 %v868
    %v2220 = vunpack.c.l.b16 %v869
    %v2221 = vunpack.c.l.b16 %v870
    %v2222 = vunpack.c.l.b16 %v871
    %v2223 = vunpack.c.l.b16 %v872
    %v2224 = vunpack.c.l.b16 %v873
    %v2225 = vunpack.c.l.b16 %v874
    %v2226 = vunpack.c.l.b16 %v875
    %v2227 = vunpack.c.l.b16 %v876
    %v2228 = vunpack.c.l.b16 %v877
    %v2229 = vunpack.c.l.b16 %v878
    %v2230 = vunpack.c.l.b16 %v879
    %v2231 = vunpack.c.l.b16 %v880
    %v2232 = vunpack.c.l.b16 %v881
    %v2233 = vunpack.c.l.b16 %v882
    %v2234 = vunpack.c.l.b16 %v883
    %v2235 = vunpack.c.l.b16 %v884
    %v2236 = vunpack.c.l.b16 %v885
    %v2237 = vunpack.c.l.b16 %v886
    %v2238 = vunpack.c.l.b16 %v887
    %v2239 = vunpack.c.l.b16 %v888
    %v2240 = vunpack.c.l.b16 %v889
    %v2241 = vunpack.c.l.b16 %v890
    %v2242 = vunpack.c.l.b16 %v891
    %v2243 = vunpack.c.l.b16 %v892
    %v2244 = vunpack.c.l.b16 %v893
    %v2245 = vunpack.c.l.b16 %v894
    %v2246 = vunpack.c.l.b16 %v895
    %v2247 = vunpack.c.l.b16 %v896
    %v2248 = vunpack.c.l.b16 %v897
    %v2249 = vunpack.c.l.b16 %v898
    %v2250 = vunpack.c.l.b16 %v899
    %v2251 = vunpack.c.l.b16 %v900
    %v2252 = vunpack.c.l.b16 %v901
    %v2253 = vunpack.c.l.b16 %v902
    %v2254 = vunpack.c.l.b16 %v903
    %v2255 = vunpack.c.l.b16 %v904
    %v2256 = vunpack.c.l.b16 %v905
    %v2257 = vunpack.c.l.b16 %v906
    %v2258 = vunpack.c.l.b16 %v907
    %v2259 = vunpack.c.l.b16 %v908
    %v2260 = vunpack.c.l.b16 %v909
    %v2261 = vunpack.c.l.b16 %v910
    %v2262 = vunpack.c.l.b16 %v911
    %v2263 = vunpack.c.l.b16 %v912
    %v2264 = vunpack.c.l.b16 %v913
    %v2265 = vunpack.c.l.b16 %v914
    %v2266 = vunpack.c.l.b16 %v915
    %v2267 = vunpack.c.l.b16 %v916
    %v2268 = vunpack.c.l.b16 %v917
    %v2269 = vunpack.c.l.b16 %v918
    %v2270 = vunpack.c.l.b16 %v919
    %v2271 = vunpack.c.l.b16 %v920
    %v2272 = vunpack.c.l.b16 %v921
    %v2273 = vunpack.c.l.b16 %v922
    %v2274 = vunpack.c.l.b16 %v923
    %v2275 = vunpack.c.l.b16 %v924
    %v2276 = vunpack.c.l.b16 %v925
    %v2277 = vunpack.c.l.b16 %v926
    %v2278 = vunpack.c.l.b16 %v927
    %v2279 = vunpack.c.l.b16 %v928
    %v2280 = vunpack.c.l.b16 %v929
    %v2281 = vunpack.c.l.b16 %v930
    %v2282 = vunpack.c.l.b16 %v931
    %v2283 = vunpack.c.l.b16 %v932
    %v2284 = vunpack.c.l.b16 %v933
    %v2285 = vunpack.c.l.b16 %v934
    %v2286 = vunpack.c.l.b16 %v935
    %v2287 = vunpack.c.l.b16 %v936
    %v2288 = vunpack.c.l.b16 %v937
    %v2289 = vunpack.c.l.b16 %v938
    %v2290 = vunpack.c.l.b16 %v939
    %v2291 = vunpack.c.l.b16 %v940
    %v2292 = vunpack.c.l.b16 %v941
    %v2293 = vunpack.c.l.b16 %v942
    %v2294 = vunpack.c.l.b16 %v943
    %v2295 = vunpack.c.l.b16 %v944
    %v2296 = vunpack.c.l.b16 %v945
    %v2297 = vunpack.c.l.b16 %v946
    %v2298 = vunpack.c.l.b16 %v947
    %v2299 = vunpack.c.l.b16 %v948
    %v2300 = vunpack.c.l.b16 %v949
    %v2301 = vunpack.c.l.b16 %v950
    %v2302 = vunpack.c.l.b16 %v951
    %v2303 = vunpack.c.l.b16 %v952
    %v2304 = vunpack.c.l.b16 %v953
    %v2305 = vunpack.c.l.b16 %v954
    %v2306 = vunpack.c.l.b16 %v955
    %v2307 = vunpack.c.l.b16 %v956
    %v2308 = vunpack.c.l.b16 %v957
    %v2309 = vunpack.c.l.b16 %v958
    %v2310 = vunpack.c.l.b16 %v959
    %v2311 = vunpack.c.l.b16 %v960
    %v2312 = vunpack.c.l.b16 %v961
    %v2313 = vunpack.c.l.b16 %v962
    %v2314 = vunpack.c.l.b16 %v963
    %v2315 = vunpack.c.l.b16 %v964
    %v2316 = vunpack.c.l.b16 %v965
    %v2317 = vunpack.c.l.b16 %v966
    %v2318 = vunpack.c.l.b16 %v967
    %v2319 = vunpack.c.l.b16 %v968
    %v2320 = vunpack.c.l.b16 %v969
    %v2321 = vunpack.c.l.b16 %v970
    %v2322 = vunpack.c.l.b16 %v971
    %v2323 = vpack.c.b16 %v1652, %v1651
    %v2324 = vpack.c.b16 %v1654, %v1653
    %v2325 = vpack.c.b16 %v1656, %v1655
    %v2326 = vpack.c.b16 %v1658, %v1657
    %v2327 = vpack.c.b16 %v1660, %v1659
    %v2328 = vpack.c.b16 %v1662, %v1661
    %v2329 = vpack.c.b16 %v1664, %v1663
    %v2330 = vpack.c.b16 %v1666, %v1665
    %v2331 = vpack.c.b16 %v1668, %v1667
    %v2332 = vpack.c.b16 %v1670, %v1669
    %v2333 = vpack.c.b16 %v1672, %v1671
    %v2334 = vpack.c.b16 %v1674, %v1673
    %v2335 = vpack.c.b16 %v1676, %v1675
    %v2336 = vpack.c.b16 %v1678, %v1677
    %v2337 = vpack.c.b16 %v1680, %v1679
    %v2338 = vpack.c.b16 %v1682, %v1681
    %v2339 = vpack.c.b16 %v1684, %v1683
    %v2340 = vpack.c.b16 %v1686, %v1685
    %v2341 = vpack.c.b16 %v1688, %v1687
    %v2342 = vpack.c.b16 %v1690, %v1689
    %v2343 = vpack.c.b16 %v1692, %v1691
    %v2344 = vpack.c.b16 %v1694, %v1693
    %v2345 = vpack.c.b16 %v1696, %v1695
    %v2346 = vpack.c.b16 %v1698, %v1697
    %v2347 = vpack.c.b16 %v1700, %v1699
    %v2348 = vpack.c.b16 %v1702, %v1701
    %v2349 = vpack.c.b16 %v1704, %v1703
    %v2350 = vpack.c.b16 %v1706, %v1705
    %v2351 = vpack.c.b16 %v1708, %v1707
    %v2352 = vpack.c.b16 %v1710, %v1709
    %v2353 = vpack.c.b16 %v1712, %v1711
    %v2354 = vpack.c.b16 %v1714, %v1713
    %v2355 = vpack.c.b16 %v1716, %v1715
    %v2356 = vpack.c.b16 %v1718, %v1717
    %v2357 = vpack.c.b16 %v1720, %v1719
    %v2358 = vpack.c.b16 %v1722, %v1721
    %v2359 = vpack.c.b16 %v1724, %v1723
    %v2360 = vpack.c.b16 %v1726, %v1725
    %v2361 = vpack.c.b16 %v1728, %v1727
    %v2362 = vpack.c.b16 %v1730, %v1729
    %v2363 = vpack.c.b16 %v1732, %v1731
    %v2364 = vpack.c.b16 %v1734, %v1733
    %v2365 = vpack.c.b16 %v1736, %v1735
    %v2366 = vpack.c.b16 %v1738, %v1737
    %v2367 = vpack.c.b16 %v1740, %v1739
    %v2368 = vpack.c.b16 %v1742, %v1741
    %v2369 = vpack.c.b16 %v1744, %v1743
    %v2370 = vpack.c.b16 %v1746, %v1745
    %v2371 = vpack.c.b16 %v1748, %v1747
    %v2372 = vpack.c.b16 %v1750, %v1749
    %v2373 = vpack.c.b16 %v1752, %v1751
    %v2374 = vpack.c.b16 %v1754, %v1753
    %v2375 = vpack.c.b16 %v1756, %v1755
    %v2376 = vpack.c.b16 %v1758, %v1757
    %v2377 = vpack.c.b16 %v1760, %v1759
    %v2378 = vpack.c.b16 %v1762, %v1761
    %v2379 = vpack.c.b16 %v1764, %v1763
    %v2380 = vpack.c.b16 %v1766, %v1765
    %v2381 = vpack.c.b16 %v1768, %v1767
    %v2382 = vpack.c.b16 %v1770, %v1769
    %v2383 = vpack.c.b16 %v1772, %v1771
    %v2384 = vpack.c.b16 %v1774, %v1773
    %v2385 = vpack.c.b16 %v1776, %v1775
    %v2386 = vpack.c.b16 %v1778, %v1777
    %v2387 = vpack.c.b16 %v1780, %v1779
    %v2388 = vpack.c.b16 %v1782, %v1781
    %v2389 = vpack.c.b16 %v1784, %v1783
    %v2390 = vpack.c.b16 %v1786, %v1785
    %v2391 = vpack.c.b16 %v1788, %v1787
    %v2392 = vpack.c.b16 %v1790, %v1789
    %v2393 = vpack.c.b16 %v1792, %v1791
    %v2394 = vpack.c.b16 %v1794, %v1793
    %v2395 = vpack.c.b16 %v1796, %v1795
    %v2396 = vpack.c.b16 %v1798, %v1797
    %v2397 = vpack.c.b16 %v1800, %v1799
    %v2398 = vpack.c.b16 %v1802, %v1801
    %v2399 = vpack.c.b16 %v1804, %v1803
    %v2400 = vpack.c.b16 %v1806, %v1805
    %v2401 = vpack.c.b16 %v1808, %v1807
    %v2402 = vpack.c.b16 %v1810, %v1809
    %v2403 = vpack.c.b16 %v1812, %v1811
    %v2404 = vpack.c.b16 %v1814, %v1813
    %v2405 = vpack.c.b16 %v1816, %v1815
    %v2406 = vpack.c.b16 %v1818, %v1817
    %v2407 = vpack.c.b16 %v1820, %v1819
    %v2408 = vpack.c.b16 %v1822, %v1821
    %v2409 = vpack.c.b16 %v1824, %v1823
    %v2410 = vpack.c.b16 %v1826, %v1825
    %v2411 = vpack.c.b16 %v1828, %v1827
    %v2412 = vpack.c.b16 %v1830, %v1829
    %v2413 = vpack.c.b16 %v1832, %v1831
    %v2414 = vpack.c.b16 %v1834, %v1833
    %v2415 = vpack.c.b16 %v1836, %v1835
    %v2416 = vpack.c.b16 %v1838, %v1837
    %v2417 = vpack.c.b16 %v1840, %v1839
    %v2418 = vpack.c.b16 %v1842, %v1841
    %v2419 = vpack.c.b16 %v1844, %v1843
    %v2420 = vpack.c.b16 %v1846, %v1845
    %v2421 = vpack.c.b16 %v1848, %v1847
    %v2422 = vpack.c.b16 %v1850, %v1849
    %v2423 = vpack.c.b16 %v1852, %v1851
    %v2424 = vpack.c.b16 %v1854, %v1853
    %v2425 = vpack.c.b16 %v1856, %v1855
    %v2426 = vpack.c.b16 %v1858, %v1857
    %v2427 = vpack.c.b16 %v1860, %v1859
    %v2428 = vpack.c.b16 %v1862, %v1861
    %v2429 = vpack.c.b16 %v1864, %v1863
    %v2430 = vpack.c.b16 %v1866, %v1865
    %v2431 = vpack.c.b16 %v1868, %v1867
    %v2432 = vpack.c.b16 %v1870, %v1869
    %v2433 = vpack.c.b16 %v1872, %v1871
    %v2434 = vpack.c.b16 %v1874, %v1873
    %v2435 = vpack.c.b16 %v1876, %v1875
    %v2436 = vpack.c.b16 %v1878, %v1877
    %v2437 = vpack.c.b16 %v1880, %v1879
    %v2438 = vpack.c.b16 %v1882, %v1881
    %v2439 = vpack.c.b16 %v1884, %v1883
    %v2440 = vpack.c.b16 %v1886, %v1885
    %v2441 = vpack.c.b16 %v1888, %v1887
    %v2442 = vpack.c.b16 %v1890, %v1889
    %v2443 = vpack.c.b16 %v1892, %v1891
    %v2444 = vpack.c.b16 %v1894, %v1893
    %v2445 = vpack.c.b16 %v1896, %v1895
    %v2446 = vpack.c.b16 %v1898, %v1897
    %v2447 = vpack.c.b16 %v1900, %v1899
    %v2448 = vpack.c.b16 %v1902, %v1901
    %v2449 = vpack.c.b16 %v1904, %v1903
    %v2450 = vpack.c.b16 %v1906, %v1905
    %v2451 = vpack.c.b16 %v1908, %v1907
    %v2452 = vpack.c.b16 %v1910, %v1909
    %v2453 = vpack.c.b16 %v1912, %v1911
    %v2454 = vpack.c.b16 %v1914, %v1913
    %v2455 = vpack.c.b16 %v1916, %v1915
    %v2456 = vpack.c.b16 %v1918, %v1917
    %v2457 = vpack.c.b16 %v1920, %v1919
    %v2458 = vpack.c.b16 %v1922, %v1921
    %v2459 = vpack.c.b16 %v1924, %v1923
    %v2460 = vpack.c.b16 %v1926, %v1925
    %v2461 = vpack.c.b16 %v1928, %v1927
    %v2462 = vpack.c.b16 %v1930, %v1929
    %v2463 = vpack.c.b16 %v1932, %v1931
    %v2464 = vpack.c.b16 %v1934, %v1933
    %v2465 = vpack.c.b16 %v1936, %v1935
    %v2466 = vpack.c.b16 %v1938, %v1937
    %v2467 = vpack.c.b16 %v1940, %v1939
    %v2468 = vpack.c.b16 %v1942, %v1941
    %v2469 = vpack.c.b16 %v1944, %v1943
    %v2470 = vpack.c.b16 %v1946, %v1945
    %v2471 = vpack.c.b16 %v1948, %v1947
    %v2472 = vpack.c.b16 %v1950, %v1949
    %v2473 = vpack.c.b16 %v1952, %v1951
    %v2474 = vpack.c.b16 %v1954, %v1953
    %v2475 = vpack.c.b16 %v1956, %v1955
    %v2476 = vpack.c.b16 %v1958, %v1957
    %v2477 = vpack.c.b16 %v1960, %v1959
    %v2478 = vpack.c.b16 %v1962, %v1961
    %v2479 = vpack.c.b16 %v1964, %v1963
    %v2480 = vpack.c.b16 %v1966, %v1965
    %v2481 = vpack.c.b16 %v1968, %v1967
    %v2482 = vpack.c.b16 %v1970, %v1969
    %v2483 = vpack.c.b16 %v1972, %v1971
    %v2484 = vpack.c.b16 %v1974, %v1973
    %v2485 = vpack.c.b16 %v1976, %v1975
    %v2486 = vpack.c.b16 %v1978, %v1977
    %v2487 = vpack.c.b16 %v1980, %v1979
    %v2488 = vpack.c.b16 %v1982, %v1981
    %v2489 = vpack.c.b16 %v1984, %v1983
    %v2490 = vpack.c.b16 %v1986, %v1985
    %v2491 = vpack.c.b16 %v1988, %v1987
    %v2492 = vpack.c.b16 %v1990, %v1989
    %v2493 = vpack.c.b16 %v1992, %v1991
    %v2494 = vpack.c.b16 %v1994, %v1993
    %v2495 = vpack.c.b16 %v1996, %v1995
    %v2496 = vpack.c.b16 %v1998, %v1997
    %v2497 = vpack.c.b16 %v2000, %v1999
    %v2498 = vpack.c.b16 %v2002, %v2001
    %v2499 = vpack.c.b16 %v2004, %v2003
    %v2500 = vpack.c.b16 %v2006, %v2005
    %v2501 = vpack.c.b16 %v2008, %v2007
    %v2502 = vpack.c.b16 %v2010, %v2009
    %v2503 = vpack.c.b16 %v2012, %v2011
    %v2504 = vpack.c.b16 %v2014, %v2013
    %v2505 = vpack.c.b16 %v2016, %v2015
    %v2506 = vpack.c.b16 %v2018, %v2017
    %v2507 = vpack.c.b16 %v2020, %v2019
    %v2508 = vpack.c.b16 %v2022, %v2021
    %v2509 = vpack.c.b16 %v2024, %v2023
    %v2510 = vpack.c.b16 %v2026, %v2025
    %v2511 = vpack.c.b16 %v2028, %v2027
    %v2512 = vpack.c.b16 %v2030, %v2029
    %v2513 = vpack.c.b16 %v2032, %v2031
    %v2514 = vpack.c.b16 %v2034, %v2033
    %v2515 = vpack.c.b16 %v2036, %v2035
    %v2516 = vpack.c.b16 %v2038, %v2037
    %v2517 = vpack.c.b16 %v2040, %v2039
    %v2518 = vpack.c.b16 %v2042, %v2041
    %v2519 = vpack.c.b16 %v2044, %v2043
    %v2520 = vpack.c.b16 %v2046, %v2045
    %v2521 = vpack.c.b16 %v2048, %v2047
    %v2522 = vpack.c.b16 %v2050, %v2049
    %v2523 = vpack.c.b16 %v2052, %v2051
    %v2524 = vpack.c.b16 %v2054, %v2053
    %v2525 = vpack.c.b16 %v2056, %v2055
    %v2526 = vpack.c.b16 %v2058, %v2057
    %v2527 = vpack.c.b16 %v2060, %v2059
    %v2528 = vpack.c.b16 %v2062, %v2061
    %v2529 = vpack.c.b16 %v2064, %v2063
    %v2530 = vpack.c.b16 %v2066, %v2065
    %v2531 = vpack.c.b16 %v2068, %v2067
    %v2532 = vpack.c.b16 %v2070, %v2069
    %v2533 = vpack.c.b16 %v2072, %v2071
    %v2534 = vpack.c.b16 %v2074, %v2073
    %v2535 = vpack.c.b16 %v2076, %v2075
    %v2536 = vpack.c.b16 %v2078, %v2077
    %v2537 = vpack.c.b16 %v2080, %v2079
    %v2538 = vpack.c.b16 %v2082, %v2081
    %v2539 = vpack.c.b16 %v2084, %v2083
    %v2540 = vpack.c.b16 %v2086, %v2085
    %v2541 = vpack.c.b16 %v2088, %v2087
    %v2542 = vpack.c.b16 %v2090, %v2089
    %v2543 = vpack.c.b16 %v2092, %v2091
    %v2544 = vpack.c.b16 %v2094, %v2093
    %v2545 = vpack.c.b16 %v2096, %v2095
    %v2546 = vpack.c.b16 %v2098, %v2097
    %v2547 = vpack.c.b16 %v2100, %v2099
    %v2548 = vpack.c.b16 %v2102, %v2101
    %v2549 = vpack.c.b16 %v2104, %v2103
    %v2550 = vpack.c.b16 %v2106, %v2105
    %v2551 = vpack.c.b16 %v2108, %v2107
    %v2552 = vpack.c.b16 %v2110, %v2109
    %v2553 = vpack.c.b16 %v2112, %v2111
    %v2554 = vpack.c.b16 %v2114, %v2113
    %v2555 = vpack.c.b16 %v2116, %v2115
    %v2556 = vpack.c.b16 %v2118, %v2117
    %v2557 = vpack.c.b16 %v2120, %v2119
    %v2558 = vpack.c.b16 %v2122, %v2121
    %v2559 = vpack.c.b16 %v2124, %v2123
    %v2560 = vpack.c.b16 %v2126, %v2125
    %v2561 = vpack.c.b16 %v2128, %v2127
    %v2562 = vpack.c.b16 %v2130, %v2129
    %v2563 = vpack.c.b16 %v2132, %v2131
    %v2564 = vpack.c.b16 %v2134, %v2133
    %v2565 = vpack.c.b16 %v2136, %v2135
    %v2566 = vpack.c.b16 %v2138, %v2137
    %v2567 = vpack.c.b16 %v2140, %v2139
    %v2568 = vpack.c.b16 %v2142, %v2141
    %v2569 = vpack.c.b16 %v2144, %v2143
    %v2570 = vpack.c.b16 %v2146, %v2145
    %v2571 = vpack.c.b16 %v2148, %v2147
    %v2572 = vpack.c.b16 %v2150, %v2149
    %v2573 = vpack.c.b16 %v2152, %v2151
    %v2574 = vpack.c.b16 %v2154, %v2153
    %v2575 = vpack.c.b16 %v2156, %v2155
    %v2576 = vpack.c.b16 %v2158, %v2157
    %v2577 = vpack.c.b16 %v2160, %v2159
    %v2578 = vpack.c.b16 %v2162, %v2161
    %v2579 = vpack.c.b16 %v2164, %v2163
    %v2580 = vpack.c.b16 %v2166, %v2165
    %v2581 = vpack.c.b16 %v2168, %v2167
    %v2582 = vpack.c.b16 %v2170, %v2169
    %v2583 = vpack.c.b16 %v2172, %v2171
    %v2584 = vpack.c.b16 %v2174, %v2173
    %v2585 = vpack.c.b16 %v2176, %v2175
    %v2586 = vpack.c.b16 %v2178, %v2177
    %v2587 = vpack.c.b16 %v2180, %v2179
    %v2588 = vpack.c.b16 %v2182, %v2181
    %v2589 = vpack.c.b16 %v2184, %v2183
    %v2590 = vpack.c.b16 %v2186, %v2185
    %v2591 = vpack.c.b16 %v2188, %v2187
    %v2592 = vpack.c.b16 %v2190, %v2189
    %v2593 = vpack.c.b16 %v2192, %v2191
    %v2594 = vpack.c.b16 %v2194, %v2193
    %v2595 = vpack.c.b16 %v2196, %v2195
    %v2596 = vpack.c.b16 %v2198, %v2197
    %v2597 = vpack.c.b16 %v2200, %v2199
    %v2598 = vpack.c.b16 %v2202, %v2201
    %v2599 = vpack.c.b16 %v2204, %v2203
    %v2600 = vpack.c.b16 %v2206, %v2205
    %v2601 = vpack.c.b16 %v2208, %v2207
    %v2602 = vpack.c.b16 %v2210, %v2209
    %v2603 = vpack.c.b16 %v2212, %v2211
    %v2604 = vpack.c.b16 %v2214, %v2213
    %v2605 = vpack.c.b16 %v2216, %v2215
    %v2606 = vpack.c.b16 %v2218, %v2217
    %v2607 = vpack.c.b16 %v2220, %v2219
    %v2608 = vpack.c.b16 %v2222, %v2221
    %v2609 = vpack.c.b16 %v2224, %v2223
    %v2610 = vpack.c.b16 %v2226, %v2225
    %v2611 = vpack.c.b16 %v2228, %v2227
    %v2612 = vpack.c.b16 %v2230, %v2229
    %v2613 = vpack.c.b16 %v2232, %v2231
    %v2614 = vpack.c.b16 %v2234, %v2233
    %v2615 = vpack.c.b16 %v2236, %v2235
    %v2616 = vpack.c.b16 %v2238, %v2237
    %v2617 = vpack.c.b16 %v2240, %v2239
    %v2618 = vpack.c.b16 %v2242, %v2241
    %v2619 = vpack.c.b16 %v2244, %v2243
    %v2620 = vpack.c.b16 %v2246, %v2245
    %v2621 = vpack.c.b16 %v2248, %v2247
    %v2622 = vpack.c.b16 %v2250, %v2249
    %v2623 = vpack.c.b16 %v2252, %v2251
    %v2624 = vpack.c.b16 %v2254, %v2253
    %v2625 = vpack.c.b16 %v2256, %v2255
    %v2626 = vpack.c.b16 %v2258, %v2257
    %v2627 = vpack.c.b16 %v2260, %v2259
    %v2628 = vpack.c.b16 %v2262, %v2261
    %v2629 = vpack.c.b16 %v2264, %v2263
    %v2630 = vpack.c.b16 %v2266, %v2265
    %v2631 = vpack.c.b16 %v2268, %v2267
    %v2632 = vpack.c.b16 %v2270, %v2269
    %v2633 = vpack.c.b16 %v2272, %v2271
    %v2634 = vpack.c.b16 %v2274, %v2273
    %v2635 = vpack.c.b16 %v2276, %v2275
    %v2636 = vpack.c.b16 %v2278, %v2277
    %v2637 = vpack.c.b16 %v2280, %v2279
    %v2638 = vpack.c.b16 %v2282, %v2281
    %v2639 = vpack.c.b16 %v2284, %v2283
    %v2640 = vpack.c.b16 %v2286, %v2285
    %v2641 = vpack.c.b16 %v2288, %v2287
    %v2642 = vpack.c.b16 %v2290, %v2289
    %v2643 = vpack.c.b16 %v2292, %v2291
    %v2644 = vpack.c.b16 %v2294, %v2293
    %v2645 = vpack.c.b16 %v2296, %v2295
    %v2646 = vpack.c.b16 %v2298, %v2297
    %v2647 = vpack.c.b16 %v2300, %v2299
    %v2648 = vpack.c.b16 %v2302, %v2301
    %v2649 = vpack.c.b16 %v2304, %v2303
    %v2650 = vpack.c.b16 %v2306, %v2305
    %v2651 = vpack.c.b16 %v2308, %v2307
    %v2652 = vpack.c.b16 %v2310, %v2309
    %v2653 = vpack.c.b16 %v2312, %v2311
    %v2654 = vpack.c.b16 %v2314, %v2313
    %v2655 = vpack.c.b16 %v2316, %v2315
    %v2656 = vpack.c.b16 %v2318, %v2317
    %v2657 = vpack.c.b16 %v2320, %v2319
    %v2658 = vpack.c.b16 %v2322, %v2321
    %2995 = vmatprep.subr.bf16.mxu0 0
    %2996 = vmatpush1.bf16.msra.mxu0 %v2323
    %2997 = vmatprep.subr.bf16.mxu0 0
    %2998 = vmatpush1.bf16.msra.mxu0 %v2324
    %2999 = vmatprep.subr.bf16.mxu0 0
    %3000 = vmatpush1.bf16.msra.mxu0 %v2325
    %3001 = vmatprep.subr.bf16.mxu0 0
    %3002 = vmatpush1.bf16.msra.mxu0 %v2326
    %3003 = vmatprep.subr.bf16.mxu0 0
    %3004 = vmatpush1.bf16.msra.mxu0 %v2327
    %3005 = vmatprep.subr.bf16.mxu0 0
    %3006 = vmatpush1.bf16.msra.mxu0 %v2328
    %3007 = vmatprep.subr.bf16.mxu0 0
    %3008 = vmatpush1.bf16.msra.mxu0 %v2329
    %3009 = vmatprep.subr.bf16.mxu0 0
    %3010 = vmatpush1.bf16.msra.mxu0 %v2330
    %3011 = vmatprep.subr.bf16.mxu0 0
    %3012 = vmatpush1.bf16.msra.mxu0 %v2331
    %3013 = vmatprep.subr.bf16.mxu0 0
    %3014 = vmatpush1.bf16.msra.mxu0 %v2332
    %3015 = vmatprep.subr.bf16.mxu0 0
    %3016 = vmatpush1.bf16.msra.mxu0 %v2333
    %3017 = vmatprep.subr.bf16.mxu0 0
    %3018 = vmatpush1.bf16.msra.mxu0 %v2334
    %3019 = vmatprep.subr.bf16.mxu0 0
    %3020 = vmatpush1.bf16.msra.mxu0 %v2335
    %3021 = vmatprep.subr.bf16.mxu0 0
    %3022 = vmatpush1.bf16.msra.mxu0 %v2336
    %3023 = vmatprep.subr.bf16.mxu0 0
    %3024 = vmatpush1.bf16.msra.mxu0 %v2337
    %3025 = vmatprep.subr.bf16.mxu0 0
    %3026 = vmatpush1.bf16.msra.mxu0 %v2338
    %3027 = vmatprep.mubr.bf16.mxu0 %v259
    %3028 = vmatmul.mubr.bf16.gmra.mrb[0].mxu0 %v258
    %v3029 = vpop.f32.mrb[0].mxu0
    %v3030 = vadd.f32 %v977, %v3029
    %v3031 = vpop.f32.mrb[0].mxu0
    %v3032 = vpop.f32.mrb[0].mxu0
    %v3033 = vpop.f32.mrb[0].mxu0
    %3034 = vdwg.mxu0
    %3035 = vmatprep.subr.bf16.mxu0 0
    %3036 = vmatpush1.bf16.msra.mxu0 %v2339
    %3037 = vmatprep.subr.bf16.mxu0 0
    %3038 = vmatpush1.bf16.msra.mxu0 %v2340
    %3039 = vmatprep.subr.bf16.mxu0 0
    %3040 = vmatpush1.bf16.msra.mxu0 %v2341
    %3041 = vmatprep.subr.bf16.mxu0 0
    %3042 = vmatpush1.bf16.msra.mxu0 %v2342
    %3043 = vmatprep.subr.bf16.mxu0 0
    %3044 = vmatpush1.bf16.msra.mxu0 %v2343
    %3045 = vmatprep.subr.bf16.mxu0 0
    %3046 = vmatpush1.bf16.msra.mxu0 %v2344
    %3047 = vmatprep.subr.bf16.mxu0 0
    %3048 = vmatpush1.bf16.msra.mxu0 %v2345
    %3049 = vmatprep.subr.bf16.mxu0 0
    %3050 = vmatpush1.bf16.msra.mxu0 %v2346
    %3051 = vmatprep.subr.bf16.mxu0 0
    %3052 = vmatpush1.bf16.msra.mxu0 %v2347
    %3053 = vmatprep.subr.bf16.mxu0 0
    %3054 = vmatpush1.bf16.msra.mxu0 %v2348
    %3055 = vmatprep.subr.bf16.mxu0 0
    %3056 = vmatpush1.bf16.msra.mxu0 %v2349
    %3057 = vmatprep.subr.bf16.mxu0 0
    %3058 = vmatpush1.bf16.msra.mxu0 %v2350
    %3059 = vmatprep.subr.bf16.mxu0 0
    %3060 = vmatpush1.bf16.msra.mxu0 %v2351
    %3061 = vmatprep.subr.bf16.mxu0 0
    %3062 = vmatpush1.bf16.msra.mxu0 %v2352
    %3063 = vmatprep.subr.bf16.mxu0 0
    %3064 = vmatpush1.bf16.msra.mxu0 %v2353
    %3065 = vmatprep.subr.bf16.mxu0 0
    %3066 = vmatpush1.bf16.msra.mxu0 %v2354
    %3067 = vmatprep.mubr.bf16.mxu0 %v261
    %3068 = vmatmul.mubr.bf16.gmra.mrb[0].mxu0 %v260
    %v3069 = vpop.f32.mrb[0].mxu0
    %v3070 = vadd.f32 %v3030, %v3069
    %v3071 = vpop.f32.mrb[0].mxu0
    %v3072 = vpop.f32.mrb[0].mxu0
    %v3073 = vpop.f32.mrb[0].mxu0
    %3074 = vdwg.mxu0
    %3075 = vmatprep.subr.bf16.mxu0 0
    %3076 = vmatpush1.bf16.msra.mxu0 %v2355
    %3077 = vmatprep.subr.bf16.mxu0 0
    %3078 = vmatpush1.bf16.msra.mxu0 %v2356
    %3079 = vmatprep.subr.bf16.mxu0 0
    %3080 = vmatpush1.bf16.msra.mxu0 %v2357
    %3081 = vmatprep.subr.bf16.mxu0 0
    %3082 = vmatpush1.bf16.msra.mxu0 %v2358
    %3083 = vmatprep.subr.bf16.mxu0 0
    %3084 = vmatpush1.bf16.msra.mxu0 %v2359
    %3085 = vmatprep.subr.bf16.mxu0 0
    %3086 = vmatpush1.bf16.msra.mxu0 %v2360
    %3087 = vmatprep.subr.bf16.mxu0 0
    %3088 = vmatpush1.bf16.msra.mxu0 %v2361
    %3089 = vmatprep.subr.bf16.mxu0 0
    %3090 = vmatpush1.bf16.msra.mxu0 %v2362
    %3091 = vmatprep.subr.bf16.mxu0 0
    %3092 = vmatpush1.bf16.msra.mxu0 %v2363
    %3093 = vmatprep.subr.bf16.mxu0 0
    %3094 = vmatpush1.bf16.msra.mxu0 %v2364
    %3095 = vmatprep.subr.bf16.mxu0 0
    %3096 = vmatpush1.bf16.msra.mxu0 %v2365
    %3097 = vmatprep.subr.bf16.mxu0 0
    %3098 = vmatpush1.bf16.msra.mxu0 %v2366
    %3099 = vmatprep.subr.bf16.mxu0 0
    %3100 = vmatpush1.bf16.msra.mxu0 %v2367
    %3101 = vmatprep.subr.bf16.mxu0 0
    %3102 = vmatpush1.bf16.msra.mxu0 %v2368
    %3103 = vmatprep.subr.bf16.mxu0 0
    %3104 = vmatpush1.bf16.msra.mxu0 %v2369
    %3105 = vmatprep.subr.bf16.mxu0 0
    %3106 = vmatpush1.bf16.msra.mxu0 %v2370
    %3107 = vmatprep.mubr.bf16.mxu0 %v263
    %3108 = vmatmul.mubr.bf16.gmra.mrb[0].mxu0 %v262
    %v3109 = vpop.f32.mrb[0].mxu0
    %v3110 = vadd.f32 %v3070, %v3109
    %v3111 = vpop.f32.mrb[0].mxu0
    %v3112 = vpop.f32.mrb[0].mxu0
    %v3113 = vpop.f32.mrb[0].mxu0
    %3114 = vdwg.mxu0
    %3115 = vmatprep.subr.bf16.mxu0 0
    %3116 = vmatpush1.bf16.msra.mxu0 %v2371
    %3117 = vmatprep.subr.bf16.mxu0 0
    %3118 = vmatpush1.bf16.msra.mxu0 %v2372
    %3119 = vmatprep.subr.bf16.mxu0 0
    %3120 = vmatpush1.bf16.msra.mxu0 %v2373
    %3121 = vmatprep.subr.bf16.mxu0 0
    %3122 = vmatpush1.bf16.msra.mxu0 %v2374
    %3123 = vmatprep.subr.bf16.mxu0 0
    %3124 = vmatpush1.bf16.msra.mxu0 %v2375
    %3125 = vmatprep.subr.bf16.mxu0 0
    %3126 = vmatpush1.bf16.msra.mxu0 %v2376
    %3127 = vmatprep.subr.bf16.mxu0 0
    %3128 = vmatpush1.bf16.msra.mxu0 %v2377
    %3129 = vmatprep.subr.bf16.mxu0 0
    %3130 = vmatpush1.bf16.msra.mxu0 %v2378
    %3131 = vmatprep.subr.bf16.mxu0 0
    %3132 = vmatpush1.bf16.msra.mxu0 %v2379
    %3133 = vmatprep.subr.bf16.mxu0 0
    %3134 = vmatpush1.bf16.msra.mxu0 %v2380
    %3135 = vmatprep.subr.bf16.mxu0 0
    %3136 = vmatpush1.bf16.msra.mxu0 %v2381
    %3137 = vmatprep.subr.bf16.mxu0 0
    %3138 = vmatpush1.bf16.msra.mxu0 %v2382
    %3139 = vmatprep.subr.bf16.mxu0 0
    %3140 = vmatpush1.bf16.msra.mxu0 %v2383
    %3141 = vmatprep.subr.bf16.mxu0 0
    %3142 = vmatpush1.bf16.msra.mxu0 %v2384
    %3143 = vmatprep.subr.bf16.mxu0 0
    %3144 = vmatpush1.bf16.msra.mxu0 %v2385
    %3145 = vmatprep.subr.bf16.mxu0 0
    %3146 = vmatpush1.bf16.msra.mxu0 %v2386
    %3147 = vmatprep.mubr.bf16.mxu0 %v265
    %3148 = vmatmul.mubr.bf16.gmra.mrb[0].mxu0 %v264
    %v3149 = vpop.f32.mrb[0].mxu0
    %v3150 = vadd.f32 %v3110, %v3149
    %v3151 = vpop.f32.mrb[0].mxu0
    %v3152 = vpop.f32.mrb[0].mxu0
    %v3153 = vpop.f32.mrb[0].mxu0
    %3154 = vdwg.mxu0
    %3155 = vmatprep.subr.bf16.mxu0 0
    %3156 = vmatpush1.bf16.msra.mxu0 %v2387
    %3157 = vmatprep.subr.bf16.mxu0 0
    %3158 = vmatpush1.bf16.msra.mxu0 %v2388
    %3159 = vmatprep.subr.bf16.mxu0 0
    %3160 = vmatpush1.bf16.msra.mxu0 %v2389
    %3161 = vmatprep.subr.bf16.mxu0 0
    %3162 = vmatpush1.bf16.msra.mxu0 %v2390
    %3163 = vmatprep.subr.bf16.mxu0 0
    %3164 = vmatpush1.bf16.msra.mxu0 %v2391
    %3165 = vmatprep.subr.bf16.mxu0 0
    %3166 = vmatpush1.bf16.msra.mxu0 %v2392
    %3167 = vmatprep.subr.bf16.mxu0 0
    %3168 = vmatpush1.bf16.msra.mxu0 %v2393
    %3169 = vmatprep.subr.bf16.mxu0 0
    %3170 = vmatpush1.bf16.msra.mxu0 %v2394
    %3171 = vmatprep.subr.bf16.mxu0 0
    %3172 = vmatpush1.bf16.msra.mxu0 %v2395
    %3173 = vmatprep.subr.bf16.mxu0 0
    %3174 = vmatpush1.bf16.msra.mxu0 %v2396
    %3175 = vmatprep.subr.bf16.mxu0 0
    %3176 = vmatpush1.bf16.msra.mxu0 %v2397
    %3177 = vmatprep.subr.bf16.mxu0 0
    %3178 = vmatpush1.bf16.msra.mxu0 %v2398
    %3179 = vmatprep.subr.bf16.mxu0 0
    %3180 = vmatpush1.bf16.msra.mxu0 %v2399
    %3181 = vmatprep.subr.bf16.mxu0 0
    %3182 = vmatpush1.bf16.msra.mxu0 %v2400
    %3183 = vmatprep.subr.bf16.mxu0 0
    %3184 = vmatpush1.bf16.msra.mxu0 %v2401
    %3185 = vmatprep.subr.bf16.mxu0 0
    %3186 = vmatpush1.bf16.msra.mxu0 %v2402
    %3187 = vmatprep.mubr.bf16.mxu0 %v267
    %3188 = vmatmul.mubr.bf16.gmra.mrb[0].mxu0 %v266
    %v3189 = vpop.f32.mrb[0].mxu0
    %v3190 = vadd.f32 %v3150, %v3189
    %v3191 = vpop.f32.mrb[0].mxu0
    %v3192 = vpop.f32.mrb[0].mxu0
    %v3193 = vpop.f32.mrb[0].mxu0
    %3194 = vdwg.mxu0
    %3195 = vmatprep.subr.bf16.mxu0 0
    %3196 = vmatpush1.bf16.msra.mxu0 %v2403
    %3197 = vmatprep.subr.bf16.mxu0 0
    %3198 = vmatpush1.bf16.msra.mxu0 %v2404
    %3199 = vmatprep.subr.bf16.mxu0 0
    %3200 = vmatpush1.bf16.msra.mxu0 %v2405
    %3201 = vmatprep.subr.bf16.mxu0 0
    %3202 = vmatpush1.bf16.msra.mxu0 %v2406
    %3203 = vmatprep.subr.bf16.mxu0 0
    %3204 = vmatpush1.bf16.msra.mxu0 %v2407
    %3205 = vmatprep.subr.bf16.mxu0 0
    %3206 = vmatpush1.bf16.msra.mxu0 %v2408
    %3207 = vmatprep.subr.bf16.mxu0 0
    %3208 = vmatpush1.bf16.msra.mxu0 %v2409
    %3209 = vmatprep.subr.bf16.mxu0 0
    %3210 = vmatpush1.bf16.msra.mxu0 %v2410
    %3211 = vmatprep.subr.bf16.mxu0 0
    %3212 = vmatpush1.bf16.msra.mxu0 %v2411
    %3213 = vmatprep.subr.bf16.mxu0 0
    %3214 = vmatpush1.bf16.msra.mxu0 %v2412
    %3215 = vmatprep.subr.bf16.mxu0 0
    %3216 = vmatpush1.bf16.msra.mxu0 %v2413
    %3217 = vmatprep.subr.bf16.mxu0 0
    %3218 = vmatpush1.bf16.msra.mxu0 %v2414
    %3219 = vmatprep.subr.bf16.mxu0 0
    %3220 = vmatpush1.bf16.msra.mxu0 %v2415
    %3221 = vmatprep.subr.bf16.mxu0 0
    %3222 = vmatpush1.bf16.msra.mxu0 %v2416
    %3223 = vmatprep.subr.bf16.mxu0 0
    %3224 = vmatpush1.bf16.msra.mxu0 %v2417
    %3225 = vmatprep.subr.bf16.mxu0 0
    %3226 = vmatpush1.bf16.msra.mxu0 %v2418
    %3227 = vmatprep.mubr.bf16.mxu0 %v269
    %3228 = vmatmul.mubr.bf16.gmra.mrb[0].mxu0 %v268
    %v3229 = vpop.f32.mrb[0].mxu0
    %v3230 = vadd.f32 %v3190, %v3229
    %v3231 = vpop.f32.mrb[0].mxu0
    %v3232 = vpop.f32.mrb[0].mxu0
    %v3233 = vpop.f32.mrb[0].mxu0
    %3234 = vdwg.mxu0
    %3235 = vmatprep.subr.bf16.mxu0 0
    %3236 = vmatpush1.bf16.msra.mxu0 %v2419
    %3237 = vmatprep.subr.bf16.mxu0 0
    %3238 = vmatpush1.bf16.msra.mxu0 %v2420
    %3239 = vmatprep.subr.bf16.mxu0 0
    %3240 = vmatpush1.bf16.msra.mxu0 %v2421
    %3241 = vmatprep.subr.bf16.mxu0 0
    %3242 = vmatpush1.bf16.msra.mxu0 %v2422
    %3243 = vmatprep.subr.bf16.mxu0 0
    %3244 = vmatpush1.bf16.msra.mxu0 %v2423
    %3245 = vmatprep.subr.bf16.mxu0 0
    %3246 = vmatpush1.bf16.msra.mxu0 %v2424
    %3247 = vmatprep.subr.bf16.mxu0 0
    %3248 = vmatpush1.bf16.msra.mxu0 %v2425
    %3249 = vmatprep.subr.bf16.mxu0 0
    %3250 = vmatpush1.bf16.msra.mxu0 %v2426
    %3251 = vmatprep.subr.bf16.mxu0 0
    %3252 = vmatpush1.bf16.msra.mxu0 %v2427
    %3253 = vmatprep.subr.bf16.mxu0 0
    %3254 = vmatpush1.bf16.msra.mxu0 %v2428
    %3255 = vmatprep.subr.bf16.mxu0 0
    %3256 = vmatpush1.bf16.msra.mxu0 %v2429
    %3257 = vmatprep.subr.bf16.mxu0 0
    %3258 = vmatpush1.bf16.msra.mxu0 %v2430
    %3259 = vmatprep.subr.bf16.mxu0 0
    %3260 = vmatpush1.bf16.msra.mxu0 %v2431
    %3261 = vmatprep.subr.bf16.mxu0 0
    %3262 = vmatpush1.bf16.msra.mxu0 %v2432
    %3263 = vmatprep.subr.bf16.mxu0 0
    %3264 = vmatpush1.bf16.msra.mxu0 %v2433
    %3265 = vmatprep.subr.bf16.mxu0 0
    %3266 = vmatpush1.bf16.msra.mxu0 %v2434
    %3267 = vmatprep.mubr.bf16.mxu0 %v271
    %3268 = vmatmul.mubr.bf16.gmra.mrb[0].mxu0 %v270
    %v3269 = vpop.f32.mrb[0].mxu0
    %v3270 = vadd.f32 %v3230, %v3269
    %v3271 = vpop.f32.mrb[0].mxu0
    %v3272 = vpop.f32.mrb[0].mxu0
    %v3273 = vpop.f32.mrb[0].mxu0
    %3274 = vdwg.mxu0
    %3275 = vmatprep.subr.bf16.mxu0 0
    %3276 = vmatpush1.bf16.msra.mxu0 %v2435
    %3277 = vmatprep.subr.bf16.mxu0 0
    %3278 = vmatpush1.bf16.msra.mxu0 %v2436
    %3279 = vmatprep.subr.bf16.mxu0 0
    %3280 = vmatpush1.bf16.msra.mxu0 %v2437
    %3281 = vmatprep.subr.bf16.mxu0 0
    %3282 = vmatpush1.bf16.msra.mxu0 %v2438
    %3283 = vmatprep.subr.bf16.mxu0 0
    %3284 = vmatpush1.bf16.msra.mxu0 %v2439
    %3285 = vmatprep.subr.bf16.mxu0 0
    %3286 = vmatpush1.bf16.msra.mxu0 %v2440
    %3287 = vmatprep.subr.bf16.mxu0 0
    %3288 = vmatpush1.bf16.msra.mxu0 %v2441
    %3289 = vmatprep.subr.bf16.mxu0 0
    %3290 = vmatpush1.bf16.msra.mxu0 %v2442
    %3291 = vmatprep.subr.bf16.mxu0 0
    %3292 = vmatpush1.bf16.msra.mxu0 %v2443
    %3293 = vmatprep.subr.bf16.mxu0 0
    %3294 = vmatpush1.bf16.msra.mxu0 %v2444
    %3295 = vmatprep.subr.bf16.mxu0 0
    %3296 = vmatpush1.bf16.msra.mxu0 %v2445
    %3297 = vmatprep.subr.bf16.mxu0 0
    %3298 = vmatpush1.bf16.msra.mxu0 %v2446
    %3299 = vmatprep.subr.bf16.mxu0 0
    %3300 = vmatpush1.bf16.msra.mxu0 %v2447
    %3301 = vmatprep.subr.bf16.mxu0 0
    %3302 = vmatpush1.bf16.msra.mxu0 %v2448
    %3303 = vmatprep.subr.bf16.mxu0 0
    %3304 = vmatpush1.bf16.msra.mxu0 %v2449
    %3305 = vmatprep.subr.bf16.mxu0 0
    %3306 = vmatpush1.bf16.msra.mxu0 %v2450
    %3307 = vmatprep.mubr.bf16.mxu0 %v273
    %3308 = vmatmul.mubr.bf16.gmra.mrb[0].mxu0 %v272
    %v3309 = vpop.f32.mrb[0].mxu0
    %v3310 = vadd.f32 %v3270, %v3309
    %v3311 = vpop.f32.mrb[0].mxu0
    %v3312 = vpop.f32.mrb[0].mxu0
    %v3313 = vpop.f32.mrb[0].mxu0
    %3314 = vdwg.mxu0
    %3315 = vmatprep.subr.bf16.mxu0 0
    %3316 = vmatpush1.bf16.msra.mxu0 %v2451
    %3317 = vmatprep.subr.bf16.mxu0 0
    %3318 = vmatpush1.bf16.msra.mxu0 %v2452
    %3319 = vmatprep.subr.bf16.mxu0 0
    %3320 = vmatpush1.bf16.msra.mxu0 %v2453
    %3321 = vmatprep.subr.bf16.mxu0 0
    %3322 = vmatpush1.bf16.msra.mxu0 %v2454
    %3323 = vmatprep.subr.bf16.mxu0 0
    %3324 = vmatpush1.bf16.msra.mxu0 %v2455
    %3325 = vmatprep.subr.bf16.mxu0 0
    %3326 = vmatpush1.bf16.msra.mxu0 %v2456
    %3327 = vmatprep.subr.bf16.mxu0 0
    %3328 = vmatpush1.bf16.msra.mxu0 %v2457
    %3329 = vmatprep.subr.bf16.mxu0 0
    %3330 = vmatpush1.bf16.msra.mxu0 %v2458
    %3331 = vmatprep.subr.bf16.mxu0 0
    %3332 = vmatpush1.bf16.msra.mxu0 %v2459
    %3333 = vmatprep.subr.bf16.mxu0 0
    %3334 = vmatpush1.bf16.msra.mxu0 %v2460
    %3335 = vmatprep.subr.bf16.mxu0 0
    %3336 = vmatpush1.bf16.msra.mxu0 %v2461
    %3337 = vmatprep.subr.bf16.mxu0 0
    %3338 = vmatpush1.bf16.msra.mxu0 %v2462
    %3339 = vmatprep.subr.bf16.mxu0 0
    %3340 = vmatpush1.bf16.msra.mxu0 %v2463
    %3341 = vmatprep.subr.bf16.mxu0 0
    %3342 = vmatpush1.bf16.msra.mxu0 %v2464
    %3343 = vmatprep.subr.bf16.mxu0 0
    %3344 = vmatpush1.bf16.msra.mxu0 %v2465
    %3345 = vmatprep.subr.bf16.mxu0 0
    %3346 = vmatpush1.bf16.msra.mxu0 %v2466
    %3347 = vmatprep.mubr.bf16.mxu0 %v275
    %3348 = vmatmul.mubr.bf16.gmra.mrb[0].mxu0 %v274
    %v3349 = vpop.f32.mrb[0].mxu0
    %v3350 = vadd.f32 %v3310, %v3349
    %v3351 = vpop.f32.mrb[0].mxu0
    %v3352 = vpop.f32.mrb[0].mxu0
    %v3353 = vpop.f32.mrb[0].mxu0
    %3354 = vdwg.mxu0
    %3355 = vmatprep.subr.bf16.mxu0 0
    %3356 = vmatpush1.bf16.msra.mxu0 %v2467
    %3357 = vmatprep.subr.bf16.mxu0 0
    %3358 = vmatpush1.bf16.msra.mxu0 %v2468
    %3359 = vmatprep.subr.bf16.mxu0 0
    %3360 = vmatpush1.bf16.msra.mxu0 %v2469
    %3361 = vmatprep.subr.bf16.mxu0 0
    %3362 = vmatpush1.bf16.msra.mxu0 %v2470
    %3363 = vmatprep.subr.bf16.mxu0 0
    %3364 = vmatpush1.bf16.msra.mxu0 %v2471
    %3365 = vmatprep.subr.bf16.mxu0 0
    %3366 = vmatpush1.bf16.msra.mxu0 %v2472
    %3367 = vmatprep.subr.bf16.mxu0 0
    %3368 = vmatpush1.bf16.msra.mxu0 %v2473
    %3369 = vmatprep.subr.bf16.mxu0 0
    %3370 = vmatpush1.bf16.msra.mxu0 %v2474
    %3371 = vmatprep.subr.bf16.mxu0 0
    %3372 = vmatpush1.bf16.msra.mxu0 %v2475
    %3373 = vmatprep.subr.bf16.mxu0 0
    %3374 = vmatpush1.bf16.msra.mxu0 %v2476
    %3375 = vmatprep.subr.bf16.mxu0 0
    %3376 = vmatpush1.bf16.msra.mxu0 %v2477
    %3377 = vmatprep.subr.bf16.mxu0 0
    %3378 = vmatpush1.bf16.msra.mxu0 %v2478
    %3379 = vmatprep.subr.bf16.mxu0 0
    %3380 = vmatpush1.bf16.msra.mxu0 %v2479
    %3381 = vmatprep.subr.bf16.mxu0 0
    %3382 = vmatpush1.bf16.msra.mxu0 %v2480
    %3383 = vmatprep.subr.bf16.mxu0 0
    %3384 = vmatpush1.bf16.msra.mxu0 %v2481
    %3385 = vmatprep.subr.bf16.mxu0 0
    %3386 = vmatpush1.bf16.msra.mxu0 %v2482
    %3387 = vmatprep.mubr.bf16.mxu0 %v277
    %3388 = vmatmul.mubr.bf16.gmra.mrb[0].mxu0 %v276
    %v3389 = vpop.f32.mrb[0].mxu0
    %v3390 = vadd.f32 %v3350, %v3389
    %v3391 = vpop.f32.mrb[0].mxu0
    %v3392 = vpop.f32.mrb[0].mxu0
    %v3393 = vpop.f32.mrb[0].mxu0
    %3394 = vdwg.mxu0
    %3395 = vmatprep.subr.bf16.mxu0 0
    %3396 = vmatpush1.bf16.msra.mxu0 %v2483
    %3397 = vmatprep.subr.bf16.mxu0 0
    %3398 = vmatpush1.bf16.msra.mxu0 %v2484
    %3399 = vmatprep.subr.bf16.mxu0 0
    %3400 = vmatpush1.bf16.msra.mxu0 %v2485
    %3401 = vmatprep.subr.bf16.mxu0 0
    %3402 = vmatpush1.bf16.msra.mxu0 %v2486
    %3403 = vmatprep.subr.bf16.mxu0 0
    %3404 = vmatpush1.bf16.msra.mxu0 %v2487
    %3405 = vmatprep.subr.bf16.mxu0 0
    %3406 = vmatpush1.bf16.msra.mxu0 %v2488
    %3407 = vmatprep.subr.bf16.mxu0 0
    %3408 = vmatpush1.bf16.msra.mxu0 %v2489
    %3409 = vmatprep.subr.bf16.mxu0 0
    %3410 = vmatpush1.bf16.msra.mxu0 %v2490
    %3411 = vmatprep.subr.bf16.mxu0 0
    %3412 = vmatpush1.bf16.msra.mxu0 %v2491
    %3413 = vmatprep.subr.bf16.mxu0 0
    %3414 = vmatpush1.bf16.msra.mxu0 %v2492
    %3415 = vmatprep.subr.bf16.mxu0 0
    %3416 = vmatpush1.bf16.msra.mxu0 %v2493
    %3417 = vmatprep.subr.bf16.mxu0 0
    %3418 = vmatpush1.bf16.msra.mxu0 %v2494
    %3419 = vmatprep.subr.bf16.mxu0 0
    %3420 = vmatpush1.bf16.msra.mxu0 %v2495
    %3421 = vmatprep.subr.bf16.mxu0 0
    %3422 = vmatpush1.bf16.msra.mxu0 %v2496
    %3423 = vmatprep.subr.bf16.mxu0 0
    %3424 = vmatpush1.bf16.msra.mxu0 %v2497
    %3425 = vmatprep.subr.bf16.mxu0 0
    %3426 = vmatpush1.bf16.msra.mxu0 %v2498
    %3427 = vmatprep.mubr.bf16.mxu0 %v279
    %3428 = vmatmul.mubr.bf16.gmra.mrb[0].mxu0 %v278
    %v3429 = vpop.f32.mrb[0].mxu0
    %v3430 = vadd.f32 %v3390, %v3429
    %v3431 = vpop.f32.mrb[0].mxu0
    %v3432 = vpop.f32.mrb[0].mxu0
    %v3433 = vpop.f32.mrb[0].mxu0
    %3434 = vdwg.mxu0
    %3435 = vmatprep.subr.bf16.mxu0 0
    %3436 = vmatpush1.bf16.msra.mxu0 %v2499
    %3437 = vmatprep.subr.bf16.mxu0 0
    %3438 = vmatpush1.bf16.msra.mxu0 %v2500
    %3439 = vmatprep.subr.bf16.mxu0 0
    %3440 = vmatpush1.bf16.msra.mxu0 %v2501
    %3441 = vmatprep.subr.bf16.mxu0 0
    %3442 = vmatpush1.bf16.msra.mxu0 %v2502
    %3443 = vmatprep.subr.bf16.mxu0 0
    %3444 = vmatpush1.bf16.msra.mxu0 %v2503
    %3445 = vmatprep.subr.bf16.mxu0 0
    %3446 = vmatpush1.bf16.msra.mxu0 %v2504
    %3447 = vmatprep.subr.bf16.mxu0 0
    %3448 = vmatpush1.bf16.msra.mxu0 %v2505
    %3449 = vmatprep.subr.bf16.mxu0 0
    %3450 = vmatpush1.bf16.msra.mxu0 %v2506
    %3451 = vmatprep.subr.bf16.mxu0 0
    %3452 = vmatpush1.bf16.msra.mxu0 %v2507
    %3453 = vmatprep.subr.bf16.mxu0 0
    %3454 = vmatpush1.bf16.msra.mxu0 %v2508
    %3455 = vmatprep.subr.bf16.mxu0 0
    %3456 = vmatpush1.bf16.msra.mxu0 %v2509
    %3457 = vmatprep.subr.bf16.mxu0 0
    %3458 = vmatpush1.bf16.msra.mxu0 %v2510
    %3459 = vmatprep.subr.bf16.mxu0 0
    %3460 = vmatpush1.bf16.msra.mxu0 %v2511
    %3461 = vmatprep.subr.bf16.mxu0 0
    %3462 = vmatpush1.bf16.msra.mxu0 %v2512
    %3463 = vmatprep.subr.bf16.mxu0 0
    %3464 = vmatpush1.bf16.msra.mxu0 %v2513
    %3465 = vmatprep.subr.bf16.mxu0 0
    %3466 = vmatpush1.bf16.msra.mxu0 %v2514
    %3467 = vmatprep.mubr.bf16.mxu0 %v281
    %3468 = vmatmul.mubr.bf16.gmra.mrb[0].mxu0 %v280
    %v3469 = vpop.f32.mrb[0].mxu0
    %v3470 = vadd.f32 %v3430, %v3469
    %v3471 = vpop.f32.mrb[0].mxu0
    %v3472 = vpop.f32.mrb[0].mxu0
    %v3473 = vpop.f32.mrb[0].mxu0
    %3474 = vdwg.mxu0
    %3475 = vmatprep.subr.bf16.mxu0 0
    %3476 = vmatpush1.bf16.msra.mxu0 %v2515
    %3477 = vmatprep.subr.bf16.mxu0 0
    %3478 = vmatpush1.bf16.msra.mxu0 %v2516
    %3479 = vmatprep.subr.bf16.mxu0 0
    %3480 = vmatpush1.bf16.msra.mxu0 %v2517
    %3481 = vmatprep.subr.bf16.mxu0 0
    %3482 = vmatpush1.bf16.msra.mxu0 %v2518
    %3483 = vmatprep.subr.bf16.mxu0 0
    %3484 = vmatpush1.bf16.msra.mxu0 %v2519
    %3485 = vmatprep.subr.bf16.mxu0 0
    %3486 = vmatpush1.bf16.msra.mxu0 %v2520
    %3487 = vmatprep.subr.bf16.mxu0 0
    %3488 = vmatpush1.bf16.msra.mxu0 %v2521
    %3489 = vmatprep.subr.bf16.mxu0 0
    %3490 = vmatpush1.bf16.msra.mxu0 %v2522
    %3491 = vmatprep.subr.bf16.mxu0 0
    %3492 = vmatpush1.bf16.msra.mxu0 %v2523
    %3493 = vmatprep.subr.bf16.mxu0 0
    %3494 = vmatpush1.bf16.msra.mxu0 %v2524
    %3495 = vmatprep.subr.bf16.mxu0 0
    %3496 = vmatpush1.bf16.msra.mxu0 %v2525
    %3497 = vmatprep.subr.bf16.mxu0 0
    %3498 = vmatpush1.bf16.msra.mxu0 %v2526
    %3499 = vmatprep.subr.bf16.mxu0 0
    %3500 = vmatpush1.bf16.msra.mxu0 %v2527
    %3501 = vmatprep.subr.bf16.mxu0 0
    %3502 = vmatpush1.bf16.msra.mxu0 %v2528
    %3503 = vmatprep.subr.bf16.mxu0 0
    %3504 = vmatpush1.bf16.msra.mxu0 %v2529
    %3505 = vmatprep.subr.bf16.mxu0 0
    %3506 = vmatpush1.bf16.msra.mxu0 %v2530
    %3507 = vmatprep.mubr.bf16.mxu0 %v283
    %3508 = vmatmul.mubr.bf16.gmra.mrb[0].mxu0 %v282
    %v3509 = vpop.f32.mrb[0].mxu0
    %v3510 = vadd.f32 %v3470, %v3509
    %v3511 = vpop.f32.mrb[0].mxu0
    %v3512 = vpop.f32.mrb[0].mxu0
    %v3513 = vpop.f32.mrb[0].mxu0
    %3514 = vdwg.mxu0
    %3515 = vmatprep.subr.bf16.mxu0 0
    %3516 = vmatpush1.bf16.msra.mxu0 %v2531
    %3517 = vmatprep.subr.bf16.mxu0 0
    %3518 = vmatpush1.bf16.msra.mxu0 %v2532
    %3519 = vmatprep.subr.bf16.mxu0 0
    %3520 = vmatpush1.bf16.msra.mxu0 %v2533
    %3521 = vmatprep.subr.bf16.mxu0 0
    %3522 = vmatpush1.bf16.msra.mxu0 %v2534
    %3523 = vmatprep.subr.bf16.mxu0 0
    %3524 = vmatpush1.bf16.msra.mxu0 %v2535
    %3525 = vmatprep.subr.bf16.mxu0 0
    %3526 = vmatpush1.bf16.msra.mxu0 %v2536
    %3527 = vmatprep.subr.bf16.mxu0 0
    %3528 = vmatpush1.bf16.msra.mxu0 %v2537
    %3529 = vmatprep.subr.bf16.mxu0 0
    %3530 = vmatpush1.bf16.msra.mxu0 %v2538
    %3531 = vmatprep.subr.bf16.mxu0 0
    %3532 = vmatpush1.bf16.msra.mxu0 %v2539
    %3533 = vmatprep.subr.bf16.mxu0 0
    %3534 = vmatpush1.bf16.msra.mxu0 %v2540
    %3535 = vmatprep.subr.bf16.mxu0 0
    %3536 = vmatpush1.bf16.msra.mxu0 %v2541
    %3537 = vmatprep.subr.bf16.mxu0 0
    %3538 = vmatpush1.bf16.msra.mxu0 %v2542
    %3539 = vmatprep.subr.bf16.mxu0 0
    %3540 = vmatpush1.bf16.msra.mxu0 %v2543
    %3541 = vmatprep.subr.bf16.mxu0 0
    %3542 = vmatpush1.bf16.msra.mxu0 %v2544
    %3543 = vmatprep.subr.bf16.mxu0 0
    %3544 = vmatpush1.bf16.msra.mxu0 %v2545
    %3545 = vmatprep.subr.bf16.mxu0 0
    %3546 = vmatpush1.bf16.msra.mxu0 %v2546
    %3547 = vmatprep.mubr.bf16.mxu0 %v285
    %3548 = vmatmul.mubr.bf16.gmra.mrb[0].mxu0 %v284
    %v3549 = vpop.f32.mrb[0].mxu0
    %v3550 = vadd.f32 %v3510, %v3549
    %v3551 = vpop.f32.mrb[0].mxu0
    %v3552 = vpop.f32.mrb[0].mxu0
    %v3553 = vpop.f32.mrb[0].mxu0
    %3554 = vdwg.mxu0
    %3555 = vmatprep.subr.bf16.mxu0 0
    %3556 = vmatpush1.bf16.msra.mxu0 %v2547
    %3557 = vmatprep.subr.bf16.mxu0 0
    %3558 = vmatpush1.bf16.msra.mxu0 %v2548
    %3559 = vmatprep.subr.bf16.mxu0 0
    %3560 = vmatpush1.bf16.msra.mxu0 %v2549
    %3561 = vmatprep.subr.bf16.mxu0 0
    %3562 = vmatpush1.bf16.msra.mxu0 %v2550
    %3563 = vmatprep.subr.bf16.mxu0 0
    %3564 = vmatpush1.bf16.msra.mxu0 %v2551
    %3565 = vmatprep.subr.bf16.mxu0 0
    %3566 = vmatpush1.bf16.msra.mxu0 %v2552
    %3567 = vmatprep.subr.bf16.mxu0 0
    %3568 = vmatpush1.bf16.msra.mxu0 %v2553
    %3569 = vmatprep.subr.bf16.mxu0 0
    %3570 = vmatpush1.bf16.msra.mxu0 %v2554
    %3571 = vmatprep.subr.bf16.mxu0 0
    %3572 = vmatpush1.bf16.msra.mxu0 %v2555
    %3573 = vmatprep.subr.bf16.mxu0 0
    %3574 = vmatpush1.bf16.msra.mxu0 %v2556
    %3575 = vmatprep.subr.bf16.mxu0 0
    %3576 = vmatpush1.bf16.msra.mxu0 %v2557
    %3577 = vmatprep.subr.bf16.mxu0 0
    %3578 = vmatpush1.bf16.msra.mxu0 %v2558
    %3579 = vmatprep.subr.bf16.mxu0 0
    %3580 = vmatpush1.bf16.msra.mxu0 %v2559
    %3581 = vmatprep.subr.bf16.mxu0 0
    %3582 = vmatpush1.bf16.msra.mxu0 %v2560
    %3583 = vmatprep.subr.bf16.mxu0 0
    %3584 = vmatpush1.bf16.msra.mxu0 %v2561
    %3585 = vmatprep.subr.bf16.mxu0 0
    %3586 = vmatpush1.bf16.msra.mxu0 %v2562
    %3587 = vmatprep.mubr.bf16.mxu0 %v287
    %3588 = vmatmul.mubr.bf16.gmra.mrb[0].mxu0 %v286
    %v3589 = vpop.f32.mrb[0].mxu0
    %v3590 = vadd.f32 %v3550, %v3589
    %v3591 = vpop.f32.mrb[0].mxu0
    %v3592 = vpop.f32.mrb[0].mxu0
    %v3593 = vpop.f32.mrb[0].mxu0
    %3594 = vdwg.mxu0
    %3595 = vmatprep.subr.bf16.mxu0 0
    %3596 = vmatpush1.bf16.msra.mxu0 %v2563
    %3597 = vmatprep.subr.bf16.mxu0 0
    %3598 = vmatpush1.bf16.msra.mxu0 %v2564
    %3599 = vmatprep.subr.bf16.mxu0 0
    %3600 = vmatpush1.bf16.msra.mxu0 %v2565
    %3601 = vmatprep.subr.bf16.mxu0 0
    %3602 = vmatpush1.bf16.msra.mxu0 %v2566
    %3603 = vmatprep.subr.bf16.mxu0 0
    %3604 = vmatpush1.bf16.msra.mxu0 %v2567
    %3605 = vmatprep.subr.bf16.mxu0 0
    %3606 = vmatpush1.bf16.msra.mxu0 %v2568
    %3607 = vmatprep.subr.bf16.mxu0 0
    %3608 = vmatpush1.bf16.msra.mxu0 %v2569
    %3609 = vmatprep.subr.bf16.mxu0 0
    %3610 = vmatpush1.bf16.msra.mxu0 %v2570
    %3611 = vmatprep.subr.bf16.mxu0 0
    %3612 = vmatpush1.bf16.msra.mxu0 %v2571
    %3613 = vmatprep.subr.bf16.mxu0 0
    %3614 = vmatpush1.bf16.msra.mxu0 %v2572
    %3615 = vmatprep.subr.bf16.mxu0 0
    %3616 = vmatpush1.bf16.msra.mxu0 %v2573
    %3617 = vmatprep.subr.bf16.mxu0 0
    %3618 = vmatpush1.bf16.msra.mxu0 %v2574
    %3619 = vmatprep.subr.bf16.mxu0 0
    %3620 = vmatpush1.bf16.msra.mxu0 %v2575
    %3621 = vmatprep.subr.bf16.mxu0 0
    %3622 = vmatpush1.bf16.msra.mxu0 %v2576
    %3623 = vmatprep.subr.bf16.mxu0 0
    %3624 = vmatpush1.bf16.msra.mxu0 %v2577
    %3625 = vmatprep.subr.bf16.mxu0 0
    %3626 = vmatpush1.bf16.msra.mxu0 %v2578
    %3627 = vmatprep.mubr.bf16.mxu0 %v289
    %3628 = vmatmul.mubr.bf16.gmra.mrb[0].mxu0 %v288
    %v3629 = vpop.f32.mrb[0].mxu0
    %v3630 = vadd.f32 %v3590, %v3629
    %v3631 = vpop.f32.mrb[0].mxu0
    %v3632 = vpop.f32.mrb[0].mxu0
    %v3633 = vpop.f32.mrb[0].mxu0
    %3634 = vdwg.mxu0
    %3635 = vmatprep.subr.bf16.mxu0 0
    %3636 = vmatpush1.bf16.msra.mxu0 %v2579
    %3637 = vmatprep.subr.bf16.mxu0 0
    %3638 = vmatpush1.bf16.msra.mxu0 %v2580
    %3639 = vmatprep.subr.bf16.mxu0 0
    %3640 = vmatpush1.bf16.msra.mxu0 %v2581
    %3641 = vmatprep.subr.bf16.mxu0 0
    %3642 = vmatpush1.bf16.msra.mxu0 %v2582
    %3643 = vmatprep.subr.bf16.mxu0 0
    %3644 = vmatpush1.bf16.msra.mxu0 %v2583
    %3645 = vmatprep.subr.bf16.mxu0 0
    %3646 = vmatpush1.bf16.msra.mxu0 %v2584
    %3647 = vmatprep.subr.bf16.mxu0 0
    %3648 = vmatpush1.bf16.msra.mxu0 %v2585
    %3649 = vmatprep.subr.bf16.mxu0 0
    %3650 = vmatpush1.bf16.msra.mxu0 %v2586
    %3651 = vmatprep.subr.bf16.mxu0 0
    %3652 = vmatpush1.bf16.msra.mxu0 %v2587
    %3653 = vmatprep.subr.bf16.mxu0 0
    %3654 = vmatpush1.bf16.msra.mxu0 %v2588
    %3655 = vmatprep.subr.bf16.mxu0 0
    %3656 = vmatpush1.bf16.msra.mxu0 %v2589
    %3657 = vmatprep.subr.bf16.mxu0 0
    %3658 = vmatpush1.bf16.msra.mxu0 %v2590
    %3659 = vmatprep.subr.bf16.mxu0 0
    %3660 = vmatpush1.bf16.msra.mxu0 %v2591
    %3661 = vmatprep.subr.bf16.mxu0 0
    %3662 = vmatpush1.bf16.msra.mxu0 %v2592
    %3663 = vmatprep.subr.bf16.mxu0 0
    %3664 = vmatpush1.bf16.msra.mxu0 %v2593
    %3665 = vmatprep.subr.bf16.mxu0 0
    %3666 = vmatpush1.bf16.msra.mxu0 %v2594
    %3667 = vmatprep.mubr.bf16.mxu0 %v291
    %3668 = vmatmul.mubr.bf16.gmra.mrb[0].mxu0 %v290
    %v3669 = vpop.f32.mrb[0].mxu0
    %v3670 = vadd.f32 %v3630, %v3669
    %v3671 = vpop.f32.mrb[0].mxu0
    %v3672 = vpop.f32.mrb[0].mxu0
    %v3673 = vpop.f32.mrb[0].mxu0
    %3674 = vdwg.mxu0
    %3675 = vmatprep.subr.bf16.mxu0 0
    %3676 = vmatpush1.bf16.msra.mxu0 %v2595
    %3677 = vmatprep.subr.bf16.mxu0 0
    %3678 = vmatpush1.bf16.msra.mxu0 %v2596
    %3679 = vmatprep.subr.bf16.mxu0 0
    %3680 = vmatpush1.bf16.msra.mxu0 %v2597
    %3681 = vmatprep.subr.bf16.mxu0 0
    %3682 = vmatpush1.bf16.msra.mxu0 %v2598
    %3683 = vmatprep.subr.bf16.mxu0 0
    %3684 = vmatpush1.bf16.msra.mxu0 %v2599
    %3685 = vmatprep.subr.bf16.mxu0 0
    %3686 = vmatpush1.bf16.msra.mxu0 %v2600
    %3687 = vmatprep.subr.bf16.mxu0 0
    %3688 = vmatpush1.bf16.msra.mxu0 %v2601
    %3689 = vmatprep.subr.bf16.mxu0 0
    %3690 = vmatpush1.bf16.msra.mxu0 %v2602
    %3691 = vmatprep.subr.bf16.mxu0 0
    %3692 = vmatpush1.bf16.msra.mxu0 %v2603
    %3693 = vmatprep.subr.bf16.mxu0 0
    %3694 = vmatpush1.bf16.msra.mxu0 %v2604
    %3695 = vmatprep.subr.bf16.mxu0 0
    %3696 = vmatpush1.bf16.msra.mxu0 %v2605
    %3697 = vmatprep.subr.bf16.mxu0 0
    %3698 = vmatpush1.bf16.msra.mxu0 %v2606
    %3699 = vmatprep.subr.bf16.mxu0 0
    %3700 = vmatpush1.bf16.msra.mxu0 %v2607
    %3701 = vmatprep.subr.bf16.mxu0 0
    %3702 = vmatpush1.bf16.msra.mxu0 %v2608
    %3703 = vmatprep.subr.bf16.mxu0 0
    %3704 = vmatpush1.bf16.msra.mxu0 %v2609
    %3705 = vmatprep.subr.bf16.mxu0 0
    %3706 = vmatpush1.bf16.msra.mxu0 %v2610
    %3707 = vmatprep.mubr.bf16.mxu0 %v293
    %3708 = vmatmul.mubr.bf16.gmra.mrb[0].mxu0 %v292
    %v3709 = vpop.f32.mrb[0].mxu0
    %v3710 = vadd.f32 %v3670, %v3709
    %v3711 = vpop.f32.mrb[0].mxu0
    %v3712 = vpop.f32.mrb[0].mxu0
    %v3713 = vpop.f32.mrb[0].mxu0
    %3714 = vdwg.mxu0
    %3715 = vmatprep.subr.bf16.mxu0 0
    %3716 = vmatpush1.bf16.msra.mxu0 %v2611
    %3717 = vmatprep.subr.bf16.mxu0 0
    %3718 = vmatpush1.bf16.msra.mxu0 %v2612
    %3719 = vmatprep.subr.bf16.mxu0 0
    %3720 = vmatpush1.bf16.msra.mxu0 %v2613
    %3721 = vmatprep.subr.bf16.mxu0 0
    %3722 = vmatpush1.bf16.msra.mxu0 %v2614
    %3723 = vmatprep.subr.bf16.mxu0 0
    %3724 = vmatpush1.bf16.msra.mxu0 %v2615
    %3725 = vmatprep.subr.bf16.mxu0 0
    %3726 = vmatpush1.bf16.msra.mxu0 %v2616
    %3727 = vmatprep.subr.bf16.mxu0 0
    %3728 = vmatpush1.bf16.msra.mxu0 %v2617
    %3729 = vmatprep.subr.bf16.mxu0 0
    %3730 = vmatpush1.bf16.msra.mxu0 %v2618
    %3731 = vmatprep.subr.bf16.mxu0 0
    %3732 = vmatpush1.bf16.msra.mxu0 %v2619
    %3733 = vmatprep.subr.bf16.mxu0 0
    %3734 = vmatpush1.bf16.msra.mxu0 %v2620
    %3735 = vmatprep.subr.bf16.mxu0 0
    %3736 = vmatpush1.bf16.msra.mxu0 %v2621
    %3737 = vmatprep.subr.bf16.mxu0 0
    %3738 = vmatpush1.bf16.msra.mxu0 %v2622
    %3739 = vmatprep.subr.bf16.mxu0 0
    %3740 = vmatpush1.bf16.msra.mxu0 %v2623
    %3741 = vmatprep.subr.bf16.mxu0 0
    %3742 = vmatpush1.bf16.msra.mxu0 %v2624
    %3743 = vmatprep.subr.bf16.mxu0 0
    %3744 = vmatpush1.bf16.msra.mxu0 %v2625
    %3745 = vmatprep.subr.bf16.mxu0 0
    %3746 = vmatpush1.bf16.msra.mxu0 %v2626
    %3747 = vmatprep.mubr.bf16.mxu0 %v295
    %3748 = vmatmul.mubr.bf16.gmra.mrb[0].mxu0 %v294
    %v3749 = vpop.f32.mrb[0].mxu0
    %v3750 = vadd.f32 %v3710, %v3749
    %v3751 = vpop.f32.mrb[0].mxu0
    %v3752 = vpop.f32.mrb[0].mxu0
    %v3753 = vpop.f32.mrb[0].mxu0
    %3754 = vdwg.mxu0
    %3755 = vmatprep.subr.bf16.mxu0 0
    %3756 = vmatpush1.bf16.msra.mxu0 %v2627
    %3757 = vmatprep.subr.bf16.mxu0 0
    %3758 = vmatpush1.bf16.msra.mxu0 %v2628
    %3759 = vmatprep.subr.bf16.mxu0 0
    %3760 = vmatpush1.bf16.msra.mxu0 %v2629
    %3761 = vmatprep.subr.bf16.mxu0 0
    %3762 = vmatpush1.bf16.msra.mxu0 %v2630
    %3763 = vmatprep.subr.bf16.mxu0 0
    %3764 = vmatpush1.bf16.msra.mxu0 %v2631
    %3765 = vmatprep.subr.bf16.mxu0 0
    %3766 = vmatpush1.bf16.msra.mxu0 %v2632
    %3767 = vmatprep.subr.bf16.mxu0 0
    %3768 = vmatpush1.bf16.msra.mxu0 %v2633
    %3769 = vmatprep.subr.bf16.mxu0 0
    %3770 = vmatpush1.bf16.msra.mxu0 %v2634
    %3771 = vmatprep.subr.bf16.mxu0 0
    %3772 = vmatpush1.bf16.msra.mxu0 %v2635
    %3773 = vmatprep.subr.bf16.mxu0 0
    %3774 = vmatpush1.bf16.msra.mxu0 %v2636
    %3775 = vmatprep.subr.bf16.mxu0 0
    %3776 = vmatpush1.bf16.msra.mxu0 %v2637
    %3777 = vmatprep.subr.bf16.mxu0 0
    %3778 = vmatpush1.bf16.msra.mxu0 %v2638
    %3779 = vmatprep.subr.bf16.mxu0 0
    %3780 = vmatpush1.bf16.msra.mxu0 %v2639
    %3781 = vmatprep.subr.bf16.mxu0 0
    %3782 = vmatpush1.bf16.msra.mxu0 %v2640
    %3783 = vmatprep.subr.bf16.mxu0 0
    %3784 = vmatpush1.bf16.msra.mxu0 %v2641
    %3785 = vmatprep.subr.bf16.mxu0 0
    %3786 = vmatpush1.bf16.msra.mxu0 %v2642
    %3787 = vmatprep.mubr.bf16.mxu0 %v297
    %3788 = vmatmul.mubr.bf16.gmra.mrb[0].mxu0 %v296
    %v3789 = vpop.f32.mrb[0].mxu0
    %v3790 = vadd.f32 %v3750, %v3789
    %v3791 = vpop.f32.mrb[0].mxu0
    %v3792 = vpop.f32.mrb[0].mxu0
    %v3793 = vpop.f32.mrb[0].mxu0
    %3794 = vdwg.mxu0
    %3795 = vmatprep.subr.bf16.mxu0 0
    %3796 = vmatpush1.bf16.msra.mxu0 %v2643
    %3797 = vmatprep.subr.bf16.mxu0 0
    %3798 = vmatpush1.bf16.msra.mxu0 %v2644
    %3799 = vmatprep.subr.bf16.mxu0 0
    %3800 = vmatpush1.bf16.msra.mxu0 %v2645
    %3801 = vmatprep.subr.bf16.mxu0 0
    %3802 = vmatpush1.bf16.msra.mxu0 %v2646
    %3803 = vmatprep.subr.bf16.mxu0 0
    %3804 = vmatpush1.bf16.msra.mxu0 %v2647
    %3805 = vmatprep.subr.bf16.mxu0 0
    %3806 = vmatpush1.bf16.msra.mxu0 %v2648
    %3807 = vmatprep.subr.bf16.mxu0 0
    %3808 = vmatpush1.bf16.msra.mxu0 %v2649
    %3809 = vmatprep.subr.bf16.mxu0 0
    %3810 = vmatpush1.bf16.msra.mxu0 %v2650
    %3811 = vmatprep.subr.bf16.mxu0 0
    %3812 = vmatpush1.bf16.msra.mxu0 %v2651
    %3813 = vmatprep.subr.bf16.mxu0 0
    %3814 = vmatpush1.bf16.msra.mxu0 %v2652
    %3815 = vmatprep.subr.bf16.mxu0 0
    %3816 = vmatpush1.bf16.msra.mxu0 %v2653
    %3817 = vmatprep.subr.bf16.mxu0 0
    %3818 = vmatpush1.bf16.msra.mxu0 %v2654
    %3819 = vmatprep.subr.bf16.mxu0 0
    %3820 = vmatpush1.bf16.msra.mxu0 %v2655
    %3821 = vmatprep.subr.bf16.mxu0 0
    %3822 = vmatpush1.bf16.msra.mxu0 %v2656
    %3823 = vmatprep.subr.bf16.mxu0 0
    %3824 = vmatpush1.bf16.msra.mxu0 %v2657
    %3825 = vmatprep.subr.bf16.mxu0 0
    %3826 = vmatpush1.bf16.msra.mxu0 %v2658
    %3827 = vmatprep.mubr.bf16.mxu0 %v299
    %3828 = vmatmul.mubr.bf16.gmra.mrb[0].mxu0 %v298
    %v3829 = vpop.f32.mrb[0].mxu0
    %v3830 = vadd.f32 %v3790, %v3829
    %v3831 = vpop.f32.mrb[0].mxu0
    %v3832 = vpop.f32.mrb[0].mxu0
    %v3833 = vpop.f32.mrb[0].mxu0
    %3834 = vdwg.mxu0
    %vm3835 = vcmask 50176
    %v3836 = vsel %vm3835, %v3830, -inf
    %3837 = vmax.xlane.f32.xlu0 %v3836
    %v3838 = vpop.xlane.xlu0 %3837
    %v3839 = vsub.f32 %v3830, %v3838
    %v3840 = vmul.f32 %v3839, 1.442695
    %v3841 = vpow.pop %v3840
    %v3842 = vsel %vm3835, %v3841, 0.0
    %3843 = vadd.xlane.f32.xlu0 %v3842
    %v3844 = vpop.xlane.xlu0 %3843
    %v3845 = vrcp.pop %v3844
    %v3846 = vmul.f32 %v3841, %v3845
    %3847 = vst.msk [vmem:[#allocation2] sm:$0x3] %vm3835, %v3846
    // Predicated region
    $region14: #{tpu_custom_call.1} parent=1 // pred_check
      _
    $region15: #{tpu_custom_call.1} parent=1 // pred_check_branch
      %3849 = sbr.rel (0) target = $region17
    $region16: #{tpu_custom_call.1} parent=1 // pred_region
      %s3851 = ssub.s32 32, 32
      %3852 = vsyncadd [#allocation3], %s3851
      %s3854 = sshll.u32 [#allocation2], 4
      %s3855 = int_to_ptr.vmem [resolvable:$true] %s3854
      %3857 = dma.vmem_to_hbm [thread:$0]  %s3855, 32, %s3, [#allocation3]
    $region17: #{tpu_custom_call.1} parent=1 // pred_fallthru
      _
    // Predicated region
    $region18: #{tpu_custom_call.1} parent=1 // pred_check
      _
    $region19: #{tpu_custom_call.1} parent=1 // pred_check_branch
      %3859 = sbr.rel (0) target = $region21
    $region20: #{tpu_custom_call.1} parent=1 // pred_region
      %3860 = dma.done [#allocation3], 32
    $region21: #{tpu_custom_call.1} parent=1 // pred_fallthru
      _
    %3861 = vsyncpa [#allocation3], 1

</llo_original>
